<compile_context>
chip_gen: v7x
topology: tpu7x:2x2x1
jax: 0.10.0
libtpu: 0.0.40
codegen_flags: <defaults>
</compile_context>

<pallas_src>
import functools

import jax
import jax.numpy as jnp
from jax import lax
from jax.experimental import pallas as pl
from jax.experimental.pallas import tpu as pltpu

ALPHA = 10.0
BETA = 0.01
BN_EPS = 1e-5


def _round_up(x, m):
    return -(-x // m) * m


# ----------------------------------------------------------------------------
# Kernel
# ----------------------------------------------------------------------------
def _disp_head_kernel(x_ref, w1_ref, b1_ref, w2_ref, t2_ref, o_ref, *, wp):
    # x_ref : (1, 1, R_pad, Cin) bf16 — flattened, zero-padded, halo'ed row tile
    #                                   (rows = padded spatial sites, lanes = Cin)
    # w1_ref: (9, Cin, Cmid)     bf16 — 3x3 conv taps, tap-major (dy*3 + dx)
    # b1_ref: (1, Cmid)          f32  — conv1 bias
    # w2_ref: (8, Cmid)          f32  — folded 1x1-conv row (BN1*w2*BN2*alpha), replicated x8
    # t2_ref: (1, 1)             f32  — folded output bias (BN shifts, conv2 bias, alpha, beta)
    # o_ref : (1, 1, 1, R_out)   f32  — lane-dense flat output row (crop/reshape in wrapper)
    r_out = o_ref.shape[3]

    # 3x3 conv (padding=1): each tap is a statically-offset slice of the same
    # flat slab followed by a bf16 MXU matmul accumulated in f32.
    acc = jnp.dot(x_ref[0, 0, pl.ds(0, r_out), :], w1_ref[0],
                  preferred_element_type=jnp.float32)
    for t in range(1, 9):
        dy, dx = divmod(t, 3)
        s = dy * wp + dx                      # flat-row offset of this tap
        tap = x_ref[0, 0, pl.ds(s, r_out), :]
        acc = acc + jnp.dot(tap, w1_ref[t], preferred_element_type=jnp.float32)

    # conv1 bias -> ReLU (all other affine terms are folded into w2/t2), f32.
    z = jnp.maximum(acc + b1_ref[...], 0.0)                       # (R_out, Cmid)

    # Folded 1x1 conv as one MXU NT dot contracting Cmid -> lane-dense (8, R_out)
    # (flash-attention style dimension numbers; row 0 is the result).
    y = lax.dot_general(w2_ref[...], z,
                        dimension_numbers=(((1,), (1,)), ((), ())),
                        preferred_element_type=jnp.float32)       # (8, R_out)
    o_ref[0, 0] = y[0:1, :] + t2_ref[0, 0]


# ----------------------------------------------------------------------------
# Wrapper helpers
# ----------------------------------------------------------------------------
def _vmem_capacity_bytes():
    try:
        info = pltpu.get_tpu_info()
        cap = getattr(info, "vmem_capacity_bytes", None)
        if cap:
            return int(cap)
    except Exception:
        pass
    return 64 << 20  # conservative fallback (v7x-sized VMEM)


def _tile_vmem_bytes(th, W, cin, cmid):
    """Estimated per-tile VMEM working set (double-buffered input, acc/z, etc.)."""
    wp = W + 2
    r_out = _round_up(th * wp, 8)
    r_pad = _round_up(r_out + 2 * wp + 2, 16)
    b = 0
    b += 2 * r_pad * cin * 2            # bf16 input block, double-buffered
    b += 2 * 9 * cin * cmid * 2         # bf16 conv weights
    b += 3 * r_out * cmid * 4           # acc + z + one live partial (f32)
    b += 2 * r_out * cin * 2            # realigned tap temporaries (bf16)
    b += 2 * r_out * 4 + 8 * r_out * 4  # output block (x2) + epilogue rows
    b += (10 * cmid + 16) * 4 * 4       # small param blocks
    return b + (2 << 20)                # fixed slack


def _pick_row_tile(N, H, W, cin, cmid, budget_bytes, requested=None):
    if requested is not None:
        assert H % requested == 0, "row_tile must divide H"
        return int(requested)
    divs = sorted(d for d in range(1, H + 1) if H % d == 0)
    fits = [d for d in divs if _tile_vmem_bytes(d, W, cin, cmid) <= budget_bytes]
    if not fits:
        return divs[0]
    # Prefer an even total grid size (keeps both v7x TensorCores busy).
    even = [d for d in fits if (N * (H // d)) % 2 == 0 and N * (H // d) >= 2]
    return max(even) if even else max(fits)


# ----------------------------------------------------------------------------
# Wrapper
# ----------------------------------------------------------------------------
def disp_head_forward(x_nhwc, params, *, alpha=ALPHA, beta=BETA, row_tile=None):
    """x_nhwc: (N, H, W, Cin) float32.  Returns (N, H, W, 1) float32."""
    N, H, W, Cin = x_nhwc.shape
    w1 = params["w1"]                                  # (3, 3, Cin, Cmid)
    Cmid = w1.shape[3]
    w2 = params["w2"]                                  # (Cmid, 1)
    assert w2.shape[1] == 1, "kernel specialised for out_channels == 1 (module default)"

    # Generation-aware VMEM budgeting.
    cap = _vmem_capacity_bytes()
    limit_cap = (40 << 20) if cap <= (64 << 20) else (96 << 20)
    budget = int(limit_cap / 1.5)

    th = _pick_row_tile(N, H, W, Cin, Cmid, budget, row_tile)
    n_row = H // th
    Wp = W + 2
    r_out = _round_up(th * Wp, 8)                       # accumulator / output rows
    r_pad = _round_up(r_out + 2 * Wp + 2, 16)           # slab rows (covers all tap offsets)

    # ---- fold BN1 / BN2 / conv2-bias / alpha / beta into one row + scalar ----
    s1 = params["bn1_gamma"] * lax.rsqrt(params["bn1_var"] + BN_EPS)
    t1 = params["bn1_beta"] - params["bn1_mean"] * s1
    s2 = params["bn2_gamma"] * lax.rsqrt(params["bn2_var"] + BN_EPS)
    t2 = params["bn2_beta"] - params["bn2_mean"] * s2
    w2v = w2[:, 0]
    w2_row = ((alpha * s2[0]) * s1 * w2v).astype(jnp.float32)        # (Cmid,)
    w2_eff = jnp.tile(w2_row[None, :], (8, 1))                       # (8, Cmid)
    b_eff = alpha * (s2[0] * (jnp.dot(t1, w2v) + params["b2"][0]) + t2[0]) + beta
    b_eff = jnp.reshape(b_eff, (1, 1)).astype(jnp.float32)
    b1 = params["b1"].reshape(1, Cmid).astype(jnp.float32)
    w1_taps = w1.astype(jnp.bfloat16).reshape(9, Cin, Cmid)          # tap-major, bf16

    # ---- build flattened bf16 halo'ed row tiles (layout plumbing, glue) ----
    x_bf = x_nhwc.astype(jnp.bfloat16)
    x_pad = jnp.pad(x_bf, ((0, 0), (1, 1), (1, 1), (0, 0)))          # (N, H+2, Wp, Cin)
    tiles = jnp.stack([x_pad[:, r * th: r * th + th + 2] for r in range(n_row)],
                      axis=1)                                        # (N, nR, th+2, Wp, Cin)
    xt = tiles.reshape(N, n_row, (th + 2) * Wp, Cin)
    xt = jnp.pad(xt, ((0, 0), (0, 0), (0, r_pad - (th + 2) * Wp), (0, 0)))

    est = _tile_vmem_bytes(th, W, Cin, Cmid)
    vmem_limit = int(min(limit_cap, max(32 << 20, int(1.5 * est))))

    kernel = functools.partial(_disp_head_kernel, wp=Wp)

    out_flat = pl.pallas_call(
        kernel,
        out_shape=jax.ShapeDtypeStruct((N, n_row, 1, r_out), jnp.float32),
        grid_spec=pltpu.PrefetchScalarGridSpec(
            num_scalar_prefetch=0,
            grid=(N, n_row),
            in_specs=[
                pl.BlockSpec((1, 1, r_pad, Cin), lambda n, r: (n, r, 0, 0)),
                pl.BlockSpec((9, Cin, Cmid), lambda n, r: (0, 0, 0)),
                pl.BlockSpec((1, Cmid), lambda n, r: (0, 0)),
                pl.BlockSpec((8, Cmid), lambda n, r: (0, 0)),
                pl.BlockSpec((1, 1), lambda n, r: (0, 0)),
            ],
            out_specs=pl.BlockSpec((1, 1, 1, r_out), lambda n, r: (n, r, 0, 0)),
        ),
        compiler_params=pltpu.CompilerParams(
            dimension_semantics=("parallel", "parallel"),
            vmem_limit_bytes=vmem_limit),
    )(xt, w1_taps, b1, w2_eff, b_eff)

    # Crop / reshape the flat lane-dense rows back to (N, H, W, 1) — cheap XLA glue.
    out = out_flat[:, :, 0, : th * Wp].reshape(N, n_row, th, Wp)[:, :, :, :W]
    return out.reshape(N, H, W)[..., None]


# ----------------------------------------------------------------------------
# Pure-JAX reference + test harness
# ----------------------------------------------------------------------------
def _reference_forward(x_nhwc, params, *, alpha=ALPHA, beta=BETA):
    """Pure-JAX f32 reference (NHWC) mirroring the PyTorch forward."""
    y = lax.conv_general_dilated(
        x_nhwc, params["w1"], window_strides=(1, 1), padding="SAME",
        dimension_numbers=("NHWC", "HWIO", "NHWC"))
    y = y + params["b1"]
    y = jnp.maximum(y, 0.0)
    y = params["bn1_gamma"] * (y - params["bn1_mean"]) * lax.rsqrt(
        params["bn1_var"] + BN_EPS) + params["bn1_beta"]
    y = jnp.einsum("nhwc,cd->nhwd", y, params["w2"]) + params["b2"]
    y = params["bn2_gamma"] * (y - params["bn2_mean"]) * lax.rsqrt(
        params["bn2_var"] + BN_EPS) + params["bn2_beta"]
    return alpha * y + beta


def make_params(key, cin, cmid, cout):
    ks = jax.random.split(key, 8)
    return {
        "w1": 0.05 * jax.random.normal(ks[0], (3, 3, cin, cmid), jnp.float32),
        "b1": 0.01 * jax.random.normal(ks[1], (cmid,), jnp.float32),
        "bn1_gamma": 1.0 + 0.1 * jax.random.normal(ks[2], (cmid,), jnp.float32),
        "bn1_beta": 0.05 * jax.random.normal(ks[3], (cmid,), jnp.float32),
        "bn1_mean": 0.02 * jax.random.normal(ks[4], (cmid,), jnp.float32),
        "bn1_var": jnp.abs(1.0 + 0.1 * jax.random.normal(ks[5], (cmid,), jnp.float32)),
        "w2": 0.05 * jax.random.normal(ks[6], (cmid, cout), jnp.float32),
        "b2": jnp.full((cout,), 0.02, jnp.float32),
        "bn2_gamma": jnp.full((cout,), 1.1, jnp.float32),
        "bn2_beta": jnp.full((cout,), -0.03, jnp.float32),
        "bn2_mean": jnp.full((cout,), 0.01, jnp.float32),
        "bn2_var": jnp.full((cout,), 0.9, jnp.float32),
    }


if __name__ == "__main__":
    # Small shapes consistent with the module (scaled down from 128/256/1).
    N, Cin, H, W = 2, 32, 16, 16
    Cmid, Cout = 64, 1

    key = jax.random.PRNGKey(0)
    kx, kp = jax.random.split(key)
    # PyTorch input would be NCHW (2, 32, 16, 16); kernel layout is NHWC.
    x_nchw = jax.random.normal(kx, (N, Cin, H, W), jnp.float32)
    x_nhwc = jnp.transpose(x_nchw, (0, 2, 3, 1))

    params = make_params(kp, Cin, Cmid, Cout)
    ref = _reference_forward(x_nhwc, params)

    # row_tile=8 exercises the halo'ed spatial tiling (grid = (2, 2));
    # row_tile=None exercises the auto-picked (generation-aware) tile size.
    for rt in (8, None):
        out = jax.block_until_ready(disp_head_forward(x_nhwc, params, row_tile=rt))
        assert out.shape == (N, H, W, Cout)
        max_err = float(jnp.max(jnp.abs(out - ref)))
        # bf16 matmul path: tolerance loosened vs the f32 reference.
        assert jnp.allclose(out, ref, atol=5e-2, rtol=5e-2), (
            f"mismatch vs reference (row_tile={rt}, max abs err {max_err})")

    print("KERNEL_OK")
</pallas_src>

<mosaic_0001>
module attributes {stable_mosaic.version = 11 : i64} {
  func.func @_disp_head_kernel(%arg0: i32, %arg1: i32, %arg2: memref<1x1x192x32xbf16, #tpu.memory_space<vmem>>, %arg3: memref<9x32x64xbf16, #tpu.memory_space<vmem>>, %arg4: memref<1x64xf32, #tpu.memory_space<vmem>>, %arg5: memref<8x64xf32, #tpu.memory_space<vmem>>, %arg6: memref<1x1xf32, #tpu.memory_space<vmem>>, %arg7: memref<1x1x1x144xf32, #tpu.memory_space<vmem>>) attributes {dimension_semantics = [#tpu.dimension_semantics<parallel>, #tpu.dimension_semantics<parallel>], iteration_bounds = array<i64: 2, 2>, scalar_prefetch = 0 : i64, scratch_operands = 0 : i64, tpu.core_type = #tpu.core_type<tc>, window_params = [{transform_indices = @transform_0, window_bounds = array<i64: 1, 1, 192, 32>}, {pipeline_mode = #tpu.pipeline_mode<synchronous>, transform_indices = @transform_1, window_bounds = array<i64: 9, 32, 64>}, {pipeline_mode = #tpu.pipeline_mode<synchronous>, transform_indices = @transform_2, window_bounds = array<i64: 1, 64>}, {pipeline_mode = #tpu.pipeline_mode<synchronous>, transform_indices = @transform_3, window_bounds = array<i64: 8, 64>}, {pipeline_mode = #tpu.pipeline_mode<synchronous>, transform_indices = @transform_4, window_bounds = array<i64: 1, 1>}, {transform_indices = @transform_5, window_bounds = array<i64: 1, 1, 1, 144>}]} {
    %c0 = arith.constant 0 : index
    %c0_0 = arith.constant 0 : index
    %c0_1 = arith.constant 0 : index
    %c0_2 = arith.constant 0 : index
    %0 = vector.load %arg2[%c0, %c0_0, %c0_1, %c0_2] : memref<1x1x192x32xbf16, #tpu.memory_space<vmem>>, vector<1x1x144x32xbf16>
    %1 = vector.shape_cast %0 : vector<1x1x144x32xbf16> to vector<144x32xbf16>
    %c0_3 = arith.constant 0 : index
    %c0_4 = arith.constant 0 : index
    %c0_5 = arith.constant 0 : index
    %2 = vector.load %arg3[%c0_3, %c0_4, %c0_5] : memref<9x32x64xbf16, #tpu.memory_space<vmem>>, vector<1x32x64xbf16>
    %3 = vector.shape_cast %2 : vector<1x32x64xbf16> to vector<32x64xbf16>
    %cst = arith.constant dense<0.000000e+00> : vector<144x64xf32>
    %4 = tpu.matmul %1, %3, %cst {dimension_numbers = #tpu.dot_dimension_numbers<[1], [0], [0], [1], [0, 0, 1, 1], [], []>} : vector<144x32xbf16>, vector<32x64xbf16>, vector<144x64xf32> -> vector<144x64xf32>
    %c0_6 = arith.constant 0 : index
    %c0_7 = arith.constant 0 : index
    %c1 = arith.constant 1 : index
    %c0_8 = arith.constant 0 : index
    %5 = vector.load %arg2[%c0_6, %c0_7, %c1, %c0_8] : memref<1x1x192x32xbf16, #tpu.memory_space<vmem>>, vector<1x1x144x32xbf16>
    %6 = vector.shape_cast %5 : vector<1x1x144x32xbf16> to vector<144x32xbf16>
    %c1_9 = arith.constant 1 : index
    %c0_10 = arith.constant 0 : index
    %c0_11 = arith.constant 0 : index
    %7 = vector.load %arg3[%c1_9, %c0_10, %c0_11] : memref<9x32x64xbf16, #tpu.memory_space<vmem>>, vector<1x32x64xbf16>
    %8 = vector.shape_cast %7 : vector<1x32x64xbf16> to vector<32x64xbf16>
    %cst_12 = arith.constant dense<0.000000e+00> : vector<144x64xf32>
    %9 = tpu.matmul %6, %8, %cst_12 {dimension_numbers = #tpu.dot_dimension_numbers<[1], [0], [0], [1], [0, 0, 1, 1], [], []>} : vector<144x32xbf16>, vector<32x64xbf16>, vector<144x64xf32> -> vector<144x64xf32>
    %10 = arith.addf %4, %9 : vector<144x64xf32>
    %c0_13 = arith.constant 0 : index
    %c0_14 = arith.constant 0 : index
    %c2 = arith.constant 2 : index
    %c0_15 = arith.constant 0 : index
    %11 = vector.load %arg2[%c0_13, %c0_14, %c2, %c0_15] : memref<1x1x192x32xbf16, #tpu.memory_space<vmem>>, vector<1x1x144x32xbf16>
    %12 = vector.shape_cast %11 : vector<1x1x144x32xbf16> to vector<144x32xbf16>
    %c2_16 = arith.constant 2 : index
    %c0_17 = arith.constant 0 : index
    %c0_18 = arith.constant 0 : index
    %13 = vector.load %arg3[%c2_16, %c0_17, %c0_18] : memref<9x32x64xbf16, #tpu.memory_space<vmem>>, vector<1x32x64xbf16>
    %14 = vector.shape_cast %13 : vector<1x32x64xbf16> to vector<32x64xbf16>
    %cst_19 = arith.constant dense<0.000000e+00> : vector<144x64xf32>
    %15 = tpu.matmul %12, %14, %cst_19 {dimension_numbers = #tpu.dot_dimension_numbers<[1], [0], [0], [1], [0, 0, 1, 1], [], []>} : vector<144x32xbf16>, vector<32x64xbf16>, vector<144x64xf32> -> vector<144x64xf32>
    %16 = arith.addf %10, %15 : vector<144x64xf32>
    %c0_20 = arith.constant 0 : index
    %c0_21 = arith.constant 0 : index
    %c18 = arith.constant 18 : index
    %c0_22 = arith.constant 0 : index
    %17 = vector.load %arg2[%c0_20, %c0_21, %c18, %c0_22] : memref<1x1x192x32xbf16, #tpu.memory_space<vmem>>, vector<1x1x144x32xbf16>
    %18 = vector.shape_cast %17 : vector<1x1x144x32xbf16> to vector<144x32xbf16>
    %c3 = arith.constant 3 : index
    %c0_23 = arith.constant 0 : index
    %c0_24 = arith.constant 0 : index
    %19 = vector.load %arg3[%c3, %c0_23, %c0_24] : memref<9x32x64xbf16, #tpu.memory_space<vmem>>, vector<1x32x64xbf16>
    %20 = vector.shape_cast %19 : vector<1x32x64xbf16> to vector<32x64xbf16>
    %cst_25 = arith.constant dense<0.000000e+00> : vector<144x64xf32>
    %21 = tpu.matmul %18, %20, %cst_25 {dimension_numbers = #tpu.dot_dimension_numbers<[1], [0], [0], [1], [0, 0, 1, 1], [], []>} : vector<144x32xbf16>, vector<32x64xbf16>, vector<144x64xf32> -> vector<144x64xf32>
    %22 = arith.addf %16, %21 : vector<144x64xf32>
    %c0_26 = arith.constant 0 : index
    %c0_27 = arith.constant 0 : index
    %c19 = arith.constant 19 : index
    %c0_28 = arith.constant 0 : index
    %23 = vector.load %arg2[%c0_26, %c0_27, %c19, %c0_28] : memref<1x1x192x32xbf16, #tpu.memory_space<vmem>>, vector<1x1x144x32xbf16>
    %24 = vector.shape_cast %23 : vector<1x1x144x32xbf16> to vector<144x32xbf16>
    %c4 = arith.constant 4 : index
    %c0_29 = arith.constant 0 : index
    %c0_30 = arith.constant 0 : index
    %25 = vector.load %arg3[%c4, %c0_29, %c0_30] : memref<9x32x64xbf16, #tpu.memory_space<vmem>>, vector<1x32x64xbf16>
    %26 = vector.shape_cast %25 : vector<1x32x64xbf16> to vector<32x64xbf16>
    %cst_31 = arith.constant dense<0.000000e+00> : vector<144x64xf32>
    %27 = tpu.matmul %24, %26, %cst_31 {dimension_numbers = #tpu.dot_dimension_numbers<[1], [0], [0], [1], [0, 0, 1, 1], [], []>} : vector<144x32xbf16>, vector<32x64xbf16>, vector<144x64xf32> -> vector<144x64xf32>
    %28 = arith.addf %22, %27 : vector<144x64xf32>
    %c0_32 = arith.constant 0 : index
    %c0_33 = arith.constant 0 : index
    %c20 = arith.constant 20 : index
    %c0_34 = arith.constant 0 : index
    %29 = vector.load %arg2[%c0_32, %c0_33, %c20, %c0_34] : memref<1x1x192x32xbf16, #tpu.memory_space<vmem>>, vector<1x1x144x32xbf16>
    %30 = vector.shape_cast %29 : vector<1x1x144x32xbf16> to vector<144x32xbf16>
    %c5 = arith.constant 5 : index
    %c0_35 = arith.constant 0 : index
    %c0_36 = arith.constant 0 : index
    %31 = vector.load %arg3[%c5, %c0_35, %c0_36] : memref<9x32x64xbf16, #tpu.memory_space<vmem>>, vector<1x32x64xbf16>
    %32 = vector.shape_cast %31 : vector<1x32x64xbf16> to vector<32x64xbf16>
    %cst_37 = arith.constant dense<0.000000e+00> : vector<144x64xf32>
    %33 = tpu.matmul %30, %32, %cst_37 {dimension_numbers = #tpu.dot_dimension_numbers<[1], [0], [0], [1], [0, 0, 1, 1], [], []>} : vector<144x32xbf16>, vector<32x64xbf16>, vector<144x64xf32> -> vector<144x64xf32>
    %34 = arith.addf %28, %33 : vector<144x64xf32>
    %c0_38 = arith.constant 0 : index
    %c0_39 = arith.constant 0 : index
    %c36 = arith.constant 36 : index
    %c0_40 = arith.constant 0 : index
    %35 = vector.load %arg2[%c0_38, %c0_39, %c36, %c0_40] : memref<1x1x192x32xbf16, #tpu.memory_space<vmem>>, vector<1x1x144x32xbf16>
    %36 = vector.shape_cast %35 : vector<1x1x144x32xbf16> to vector<144x32xbf16>
    %c6 = arith.constant 6 : index
    %c0_41 = arith.constant 0 : index
    %c0_42 = arith.constant 0 : index
    %37 = vector.load %arg3[%c6, %c0_41, %c0_42] : memref<9x32x64xbf16, #tpu.memory_space<vmem>>, vector<1x32x64xbf16>
    %38 = vector.shape_cast %37 : vector<1x32x64xbf16> to vector<32x64xbf16>
    %cst_43 = arith.constant dense<0.000000e+00> : vector<144x64xf32>
    %39 = tpu.matmul %36, %38, %cst_43 {dimension_numbers = #tpu.dot_dimension_numbers<[1], [0], [0], [1], [0, 0, 1, 1], [], []>} : vector<144x32xbf16>, vector<32x64xbf16>, vector<144x64xf32> -> vector<144x64xf32>
    %40 = arith.addf %34, %39 : vector<144x64xf32>
    %c0_44 = arith.constant 0 : index
    %c0_45 = arith.constant 0 : index
    %c37 = arith.constant 37 : index
    %c0_46 = arith.constant 0 : index
    %41 = vector.load %arg2[%c0_44, %c0_45, %c37, %c0_46] : memref<1x1x192x32xbf16, #tpu.memory_space<vmem>>, vector<1x1x144x32xbf16>
    %42 = vector.shape_cast %41 : vector<1x1x144x32xbf16> to vector<144x32xbf16>
    %c7 = arith.constant 7 : index
    %c0_47 = arith.constant 0 : index
    %c0_48 = arith.constant 0 : index
    %43 = vector.load %arg3[%c7, %c0_47, %c0_48] : memref<9x32x64xbf16, #tpu.memory_space<vmem>>, vector<1x32x64xbf16>
    %44 = vector.shape_cast %43 : vector<1x32x64xbf16> to vector<32x64xbf16>
    %cst_49 = arith.constant dense<0.000000e+00> : vector<144x64xf32>
    %45 = tpu.matmul %42, %44, %cst_49 {dimension_numbers = #tpu.dot_dimension_numbers<[1], [0], [0], [1], [0, 0, 1, 1], [], []>} : vector<144x32xbf16>, vector<32x64xbf16>, vector<144x64xf32> -> vector<144x64xf32>
    %46 = arith.addf %40, %45 : vector<144x64xf32>
    %c0_50 = arith.constant 0 : index
    %c0_51 = arith.constant 0 : index
    %c38 = arith.constant 38 : index
    %c0_52 = arith.constant 0 : index
    %47 = vector.load %arg2[%c0_50, %c0_51, %c38, %c0_52] : memref<1x1x192x32xbf16, #tpu.memory_space<vmem>>, vector<1x1x144x32xbf16>
    %48 = vector.shape_cast %47 : vector<1x1x144x32xbf16> to vector<144x32xbf16>
    %c8 = arith.constant 8 : index
    %c0_53 = arith.constant 0 : index
    %c0_54 = arith.constant 0 : index
    %49 = vector.load %arg3[%c8, %c0_53, %c0_54] : memref<9x32x64xbf16, #tpu.memory_space<vmem>>, vector<1x32x64xbf16>
    %50 = vector.shape_cast %49 : vector<1x32x64xbf16> to vector<32x64xbf16>
    %cst_55 = arith.constant dense<0.000000e+00> : vector<144x64xf32>
    %51 = tpu.matmul %48, %50, %cst_55 {dimension_numbers = #tpu.dot_dimension_numbers<[1], [0], [0], [1], [0, 0, 1, 1], [], []>} : vector<144x32xbf16>, vector<32x64xbf16>, vector<144x64xf32> -> vector<144x64xf32>
    %52 = arith.addf %46, %51 : vector<144x64xf32>
    %c0_56 = arith.constant 0 : index
    %c0_57 = arith.constant 0 : index
    %53 = vector.load %arg4[%c0_56, %c0_57] : memref<1x64xf32, #tpu.memory_space<vmem>>, vector<1x64xf32>
    %54 = vector.broadcast %53 : vector<1x64xf32> to vector<144x64xf32>
    %55 = arith.addf %52, %54 : vector<144x64xf32>
    %cst_58 = arith.constant 0.000000e+00 : f32
    %56 = vector.broadcast %cst_58 : f32 to vector<144x64xf32>
    %57 = arith.maximumf %55, %56 : vector<144x64xf32>
    %c0_59 = arith.constant 0 : index
    %c0_60 = arith.constant 0 : index
    %58 = vector.load %arg5[%c0_59, %c0_60] : memref<8x64xf32, #tpu.memory_space<vmem>>, vector<8x64xf32>
    %cst_61 = arith.constant dense<0.000000e+00> : vector<8x144xf32>
    %59 = tpu.matmul %58, %57, %cst_61 {dimension_numbers = #tpu.dot_dimension_numbers<[1], [1], [0], [0], [0, 0, 1, 0], [], []>} : vector<8x64xf32>, vector<144x64xf32>, vector<8x144xf32> -> vector<8x144xf32>
    %60 = vector.extract_strided_slice %59 {offsets = [0, 0], sizes = [1, 144], strides = [1, 1]} : vector<8x144xf32> to vector<1x144xf32>
    %c0_62 = arith.constant 0 : index
    %c0_63 = arith.constant 0 : index
    %61 = vector.load %arg6[%c0_62, %c0_63] : memref<1x1xf32, #tpu.memory_space<vmem>>, vector<1x1xf32>
    %62 = vector.extract %61[0, 0] : f32 from vector<1x1xf32>
    %63 = vector.broadcast %62 : f32 to vector<1x144xf32>
    %64 = arith.addf %60, %63 : vector<1x144xf32>
    %c0_64 = arith.constant 0 : index
    %c0_65 = arith.constant 0 : index
    %c0_66 = arith.constant 0 : index
    %c0_67 = arith.constant 0 : index
    %65 = vector.load %arg7[%c0_64, %c0_65, %c0_66, %c0_67] : memref<1x1x1x144xf32, #tpu.memory_space<vmem>>, vector<1x1x1x144xf32>
    %66 = vector.shape_cast %65 : vector<1x1x1x144xf32> to vector<1x144xf32>
    %67 = vector.shape_cast %64 : vector<1x144xf32> to vector<1x1x1x144xf32>
    tpu.vector_store %arg7[%c0_64, %c0_65, %c0_66, %c0_67], %67 {strides = array<i32>} : memref<1x1x1x144xf32, #tpu.memory_space<vmem>>, vector<1x1x1x144xf32>,
    return
  }
  func.func @transform_0(%arg0: i32, %arg1: i32) -> (i32, i32, i32, i32) {
    %c0_i32 = arith.constant 0 : i32
    %c0_i32_0 = arith.constant 0 : i32
    %c0_i32_1 = arith.constant 0 : i32
    return %arg0, %arg1, %c0_i32, %c0_i32_0 : i32, i32, i32, i32
  }
  func.func @transform_1(%arg0: i32, %arg1: i32) -> (i32, i32, i32) {
    %c0_i32 = arith.constant 0 : i32
    %c0_i32_0 = arith.constant 0 : i32
    %c0_i32_1 = arith.constant 0 : i32
    %c0_i32_2 = arith.constant 0 : i32
    return %c0_i32, %c0_i32_0, %c0_i32_1 : i32, i32, i32
  }
  func.func @transform_2(%arg0: i32, %arg1: i32) -> (i32, i32) {
    %c0_i32 = arith.constant 0 : i32
    %c0_i32_0 = arith.constant 0 : i32
    %c0_i32_1 = arith.constant 0 : i32
    return %c0_i32, %c0_i32_0 : i32, i32
  }
  func.func @transform_3(%arg0: i32, %arg1: i32) -> (i32, i32) {
    %c0_i32 = arith.constant 0 : i32
    %c0_i32_0 = arith.constant 0 : i32
    %c0_i32_1 = arith.constant 0 : i32
    return %c0_i32, %c0_i32_0 : i32, i32
  }
  func.func @transform_4(%arg0: i32, %arg1: i32) -> (i32, i32) {
    %c0_i32 = arith.constant 0 : i32
    %c0_i32_0 = arith.constant 0 : i32
    %c0_i32_1 = arith.constant 0 : i32
    return %c0_i32, %c0_i32_0 : i32, i32
  }
  func.func @transform_5(%arg0: i32, %arg1: i32) -> (i32, i32, i32, i32) {
    %c0_i32 = arith.constant 0 : i32
    %c0_i32_0 = arith.constant 0 : i32
    %c0_i32_1 = arith.constant 0 : i32
    return %arg0, %arg1, %c0_i32, %c0_i32_0 : i32, i32, i32, i32
  }
}

</mosaic_0001>

<llo_original>
// kernel: tpu_custom_call.1
$region0: #{tpu_custom_call.1}
  #allocation0 [shape = 'u32[]', space=smem, size = 0x4, offset = 0x4, fixed_abs, tag = 'smem constant byte address 0x4 - core index']
  #allocation1 [shape = 'u32[144,128]{1,0:T(1,128)}', space=vmem, size = 0x12000, scoped, tag = 'internal scratch']
  #allocation2 [shape = 'f32[1,1]{1,0:T(1,128)S(1)}', space=vmem, size = 0x200, scoped, tag = 'scoped memory for tpu_custom_call.1']
  %s0 = inlined_call_operand.vmem [shape: bf16[2,2,192,32], index: 0, kind: input, shape index: {}]
  %s1 = inlined_call_operand.vmem [shape: bf16[9,32,64], index: 1, kind: input, shape index: {}]
  %s2 = inlined_call_operand.vmem [shape: f32[1,64], index: 2, kind: input, shape index: {}]
  %s3 = inlined_call_operand.vmem [shape: f32[8,64], index: 3, kind: input, shape index: {}]
  %s4 = inlined_call_operand.<no memory space> [shape: f32[1,1], index: 4, kind: input, shape index: {}]
  %s5 = inlined_call_operand.hbm [shape: f32[2,2,1,144], index: 5, kind: output, shape index: {}]
  %s6 = sld [smem:[#allocation0]]
  $region53: #{tpu_custom_call.1} parent=0
    _
  %s8 = ssub.s32 1, %s6
  %s9 = scalar_select 0, %s8, %s6
  %v10 = vstv %s4
  %11 = vst [vmem:[#allocation2] sm:$0x1] %v10
  $region1: #{tpu_custom_call.1} parent=0
    #allocation3 [shape = 'u8[2048]{0}', space=vmem, size = 0x800, scoped, tag = 'output window, operand 0']
    #allocation4 [shape = 's32[2]{0}', space=sflag, size = 0x8, scoped, tag = 'scoped memory for tpu_custom_call.1']
    %12 = vsyncpa [#allocation4], 0
    %s13 = scalar_lea.sflag [#allocation4], 1
    %14 = vsyncpa %s13, 0
    loop: start=0, step=1, limit=6
    $region2: #{tpu_custom_call.1} parent=1 // loop_pre_header
      _
    $region3: #{tpu_custom_call.1} parent=1 // loop_header
      %s16 = sphi 0, %s20
      %p17 = scmp.ge.s32.totalorder %s16, 6
      %s23 = sphi 0, %s35
      %s24 = sphi 0, %s31
      %s25 = sphi 0, %s23
      %s26 = sphi 0, %s24
      %s27 = sphi 0, %s25
      %s28 = sphi 0, %s26
      %s40 = sphi 0, %s42
      %s43 = sphi 0, %s40
      %s44 = sphi 0, %s43
      %s60 = sphi 0, %s44
      %s64 = sphi 0, %s64
      %s66 = sphi 0, %s64
      %s67 = sphi 0, %s66
      %s81 = sphi 0, %s67
      %s85 = sphi 0, %s85
      %s87 = sphi 0, %s85
      %s88 = sphi 0, %s87
      %s102 = sphi 0, %s88
      %s106 = sphi 0, %s106
      %s108 = sphi 0, %s106
      %s109 = sphi 0, %s108
      %s123 = sphi 0, %s109
      %s127 = sphi 0, %s127
      %s129 = sphi 0, %s127
      %s130 = sphi 0, %s129
      %s144 = sphi 0, %s130
      %s152 = sphi 0, %s154
      %s155 = sphi 0, %s152
      %s156 = sphi 0, %s155
      %s172 = sphi 0, %s156
    $region4: #{tpu_custom_call.1} parent=1 // loop_header_branch
      %19 = sbr.rel (%p17) target = $region8
    $region5: #{tpu_custom_call.1} parent=1 // loop_body
      %s21 = ssub.s32 %s16, 1
      %s22 = ssub.s32 %s16, 2
      %s29 = sadd.s32 1, %s24
      %p30 = scmp.ge.s32.totalorder %s29, 2
      %s31 = scalar_select %p30, 0, %s29
      %s32 = sadd.s32 1, %s23
      %s33 = scalar_select %p30, %s32, %s23
      %p34 = scmp.ge.s32.totalorder %s33, 2
      %s35 = scalar_select %p34, 0, %s33
      %s36 = ssub.s32 %s23, %s35
      %s37 = ssub.s32 %s24, %s31
      %s38 = sor.u32 %s36, %s37
      %p39 = scmp.eq.s32.totalorder %s38, 0
      %s41 = sadd.s32 %s40, 1
      %s42 = scalar_select %p39, %s40, %s41
      %p45 = pneg %p39
      %p46 = scmp.eq.s32.totalorder %s16, 3
      %p47 = por %p45, %p46
      %p48 = scmp.ne.s32.totalorder %s40, %s43
      %p49 = scmp.eq.s32.totalorder %s16, 0
      %p50 = por %p48, %p49
      %p51 = scmp.ne.s32.totalorder %s40, %s43
      %p52 = scmp.eq.s32.totalorder %s21, 3
      %p53 = por %p51, %p52
      %p54 = scmp.ne.s32.totalorder %s43, %s44
      %p55 = scmp.eq.s32.totalorder %s21, 0
      %p56 = por %p54, %p55
      %p57 = scmp.ne.s32.totalorder %s43, %s44
      %p58 = scmp.eq.s32.totalorder %s22, 3
      %p59 = por %p57, %p58
      %p61 = scmp.ne.s32.totalorder %s44, %s60
      %p62 = scmp.eq.s32.totalorder %s22, 0
      %p63 = por %p61, %p62
      %s65 = sadd.s32 %s64, 1
      %p68 = scmp.eq.s32.totalorder %s16, 3
      %p69 = scmp.ne.s32.totalorder %s64, %s66
      %p70 = scmp.eq.s32.totalorder %s16, 0
      %p71 = por %p69, %p70
      %p72 = scmp.ne.s32.totalorder %s64, %s66
      %p73 = scmp.eq.s32.totalorder %s21, 3
      %p74 = por %p72, %p73
      %p75 = scmp.ne.s32.totalorder %s66, %s67
      %p76 = scmp.eq.s32.totalorder %s21, 0
      %p77 = por %p75, %p76
      %p78 = scmp.ne.s32.totalorder %s66, %s67
      %p79 = scmp.eq.s32.totalorder %s22, 3
      %p80 = por %p78, %p79
      %p82 = scmp.ne.s32.totalorder %s67, %s81
      %p83 = scmp.eq.s32.totalorder %s22, 0
      %p84 = por %p82, %p83
      %s86 = sadd.s32 %s85, 1
      %p89 = scmp.eq.s32.totalorder %s16, 3
      %p90 = scmp.ne.s32.totalorder %s85, %s87
      %p91 = scmp.eq.s32.totalorder %s16, 0
      %p92 = por %p90, %p91
      %p93 = scmp.ne.s32.totalorder %s85, %s87
      %p94 = scmp.eq.s32.totalorder %s21, 3
      %p95 = por %p93, %p94
      %p96 = scmp.ne.s32.totalorder %s87, %s88
      %p97 = scmp.eq.s32.totalorder %s21, 0
      %p98 = por %p96, %p97
      %p99 = scmp.ne.s32.totalorder %s87, %s88
      %p100 = scmp.eq.s32.totalorder %s22, 3
      %p101 = por %p99, %p100
      %p103 = scmp.ne.s32.totalorder %s88, %s102
      %p104 = scmp.eq.s32.totalorder %s22, 0
      %p105 = por %p103, %p104
      %s107 = sadd.s32 %s106, 1
      %p110 = scmp.eq.s32.totalorder %s16, 3
      %p111 = scmp.ne.s32.totalorder %s106, %s108
      %p112 = scmp.eq.s32.totalorder %s16, 0
      %p113 = por %p111, %p112
      %p114 = scmp.ne.s32.totalorder %s106, %s108
      %p115 = scmp.eq.s32.totalorder %s21, 3
      %p116 = por %p114, %p115
      %p117 = scmp.ne.s32.totalorder %s108, %s109
      %p118 = scmp.eq.s32.totalorder %s21, 0
      %p119 = por %p117, %p118
      %p120 = scmp.ne.s32.totalorder %s108, %s109
      %p121 = scmp.eq.s32.totalorder %s22, 3
      %p122 = por %p120, %p121
      %p124 = scmp.ne.s32.totalorder %s109, %s123
      %p125 = scmp.eq.s32.totalorder %s22, 0
      %p126 = por %p124, %p125
      %s128 = sadd.s32 %s127, 1
      %p131 = scmp.eq.s32.totalorder %s16, 3
      %p132 = scmp.ne.s32.totalorder %s127, %s129
      %p133 = scmp.eq.s32.totalorder %s16, 0
      %p134 = por %p132, %p133
      %p135 = scmp.ne.s32.totalorder %s127, %s129
      %p136 = scmp.eq.s32.totalorder %s21, 3
      %p137 = por %p135, %p136
      %p138 = scmp.ne.s32.totalorder %s129, %s130
      %p139 = scmp.eq.s32.totalorder %s21, 0
      %p140 = por %p138, %p139
      %p141 = scmp.ne.s32.totalorder %s129, %s130
      %p142 = scmp.eq.s32.totalorder %s22, 3
      %p143 = por %p141, %p142
      %p145 = scmp.ne.s32.totalorder %s130, %s144
      %p146 = scmp.eq.s32.totalorder %s22, 0
      %p147 = por %p145, %p146
      %s148 = ssub.s32 %s23, %s35
      %s149 = ssub.s32 %s24, %s31
      %s150 = sor.u32 %s148, %s149
      %p151 = scmp.eq.s32.totalorder %s150, 0
      %s153 = sadd.s32 %s152, 1
      %s154 = scalar_select %p151, %s152, %s153
      %p157 = pneg %p151
      %p158 = scmp.eq.s32.totalorder %s16, 3
      %p159 = por %p157, %p158
      %p160 = scmp.ne.s32.totalorder %s152, %s155
      %p161 = scmp.eq.s32.totalorder %s16, 0
      %p162 = por %p160, %p161
      %p163 = scmp.ne.s32.totalorder %s152, %s155
      %p164 = scmp.eq.s32.totalorder %s21, 3
      %p165 = por %p163, %p164
      %p166 = scmp.ne.s32.totalorder %s155, %s156
      %p167 = scmp.eq.s32.totalorder %s21, 0
      %p168 = por %p166, %p167
      %p169 = scmp.ne.s32.totalorder %s155, %s156
      %p170 = scmp.eq.s32.totalorder %s22, 3
      %p171 = por %p169, %p170
      %p173 = scmp.ne.s32.totalorder %s156, %s172
      %p174 = scmp.eq.s32.totalorder %s22, 0
      %p175 = por %p173, %p174
      %p176 = scmp.le.s32.totalorder 1, %s16
      %p177 = scmp.lt.s32.totalorder %s16, 5
      %p178 = pnand %p176, %p177
      %p179 = pneg %p178
      // Predicated region
      $region9: #{tpu_custom_call.1} parent=5 // pred_check
        _
      $region10: #{tpu_custom_call.1} parent=5 // pred_check_branch
        %181 = sbr.rel (%p178) target = $region12
      $region11: #{tpu_custom_call.1} parent=5 // pred_region
        %s182 = ssub.s32 %s16, 1
        // Predicated region
        $region13: #{tpu_custom_call.1} parent=11 // pred_check
          %p183 = pneg %p77
        $region14: #{tpu_custom_call.1} parent=11 // pred_check_branch
          %185 = sbr.rel (%p183) target = $region16
        $region15: #{tpu_custom_call.1} parent=11 // pred_region
          _
        $region16: #{tpu_custom_call.1} parent=11 // pred_fallthru
          _
        // Predicated region
        $region17: #{tpu_custom_call.1} parent=11 // pred_check
          %p186 = pneg %p98
        $region18: #{tpu_custom_call.1} parent=11 // pred_check_branch
          %188 = sbr.rel (%p186) target = $region20
        $region19: #{tpu_custom_call.1} parent=11 // pred_region
          _
        $region20: #{tpu_custom_call.1} parent=11 // pred_fallthru
          _
        // Predicated region
        $region21: #{tpu_custom_call.1} parent=11 // pred_check
          %p189 = pneg %p119
        $region22: #{tpu_custom_call.1} parent=11 // pred_check_branch
          %191 = sbr.rel (%p189) target = $region24
        $region23: #{tpu_custom_call.1} parent=11 // pred_region
          _
        $region24: #{tpu_custom_call.1} parent=11 // pred_fallthru
          _
        // Predicated region
        $region25: #{tpu_custom_call.1} parent=11 // pred_check
          %p192 = pneg %p140
        $region26: #{tpu_custom_call.1} parent=11 // pred_check_branch
          %194 = sbr.rel (%p192) target = $region28
        $region27: #{tpu_custom_call.1} parent=11 // pred_region
          _
        $region28: #{tpu_custom_call.1} parent=11 // pred_fallthru
          _
      $region12: #{tpu_custom_call.1} parent=5 // pred_fallthru
        _
      %p195 = scmp.lt.s32.totalorder %s16, 4
      // Predicated region
      $region29: #{tpu_custom_call.1} parent=5 // pred_check
        %p196 = pneg %p195
      $region30: #{tpu_custom_call.1} parent=5 // pred_check_branch
        %198 = sbr.rel (%p196) target = $region32
      $region31: #{tpu_custom_call.1} parent=5 // pred_region
        // Predicated region
        $region33: #{tpu_custom_call.1} parent=31 // pred_check
          %p199 = pneg %p50
        $region34: #{tpu_custom_call.1} parent=31 // pred_check_branch
          %201 = sbr.rel (%p199) target = $region36
        $region35: #{tpu_custom_call.1} parent=31 // pred_region
          %p202 = scmp.lt.s32.totalorder %s23, 1
          %s203 = scalar_select %p202, %s23, 1
          %p204 = scmp.lt.s32.totalorder %s24, 1
          %s205 = scalar_select %p204, %s24, 1
          %s206 = smul.addr %s205, 24
          %s207 = smul.addr %s203, 48
          %s208 = sadd.s32 %s206, %s207
          %s209 = smul.addr %s208, 4
          %s210 = scalar_lea.vmem %s0, %s209
        $region36: #{tpu_custom_call.1} parent=31 // pred_fallthru
          _
      $region32: #{tpu_custom_call.1} parent=5 // pred_fallthru
        _
      %p211 = scmp.le.s32.totalorder 1, %s16
      %p212 = scmp.lt.s32.totalorder %s16, 5
      %p213 = pnand %p211, %p212
      %p214 = pneg %p213
      // Predicated region
      $region37: #{tpu_custom_call.1} parent=5 // pred_check
        _
      $region38: #{tpu_custom_call.1} parent=5 // pred_check_branch
        %216 = sbr.rel (%p213) target = $region40
      $region39: #{tpu_custom_call.1} parent=5 // pred_region
        %s217 = ssub.s32 %s16, 1
        %p218 = scmp.lt.s32.totalorder %s25, 1
        %s219 = scalar_select %p218, %s25, 1
        %p220 = scmp.lt.s32.totalorder %s26, 1
        %s221 = scalar_select %p220, %s26, 1
        %s222 = smul.addr %s221, 24
        %s223 = smul.addr %s219, 48
        %s224 = sadd.s32 %s222, %s223
        %s225 = smul.addr %s224, 4
        %s226 = scalar_lea.vmem %s0, %s225
        %p227 = pneg %p56
        %p228 = pneg %p53
        %p229 = pneg %p77
        %p230 = pneg %p74
        %p231 = pneg %p98
        %p232 = pneg %p95
        %p233 = pneg %p119
        %p234 = pneg %p116
        %p235 = pneg %p140
        %p236 = pneg %p137
        %p237 = pneg %p168
        %p238 = pneg %p165
        %s239 = sand.u32 %s155, 1
        %s240 = scalar_lea.sflag [#allocation4], %s239
        %s241 = sand.u32 %s155, 1
        %s242 = smul.addr %s241, 2
        %s243 = scalar_lea.vmem [#allocation3], %s242
        %p244 = scmp.lt.s32.totalorder %s25, 1
        %s245 = scalar_select %p244, %s25, 1
        %p246 = scmp.lt.s32.totalorder %s26, 1
        %s247 = scalar_select %p246, %s26, 1
        %s248 = smul.addr %s247, 24
        %s249 = smul.addr %s245, 48
        %s250 = sadd.s32 %s248, %s249
        %s251 = smul.addr %s250, 4
        %s252 = scalar_lea.vmem %s0, %s251
        %v254 = vld [vmem:[%s252] sm:$0xf]
        %v255 = vld [vmem:[%s252 + $0x4] sm:$0xf]
        %v256 = vld [vmem:[%s252 + $0x8] sm:$0xf]
        %v257 = vld [vmem:[%s252 + $0xc] sm:$0xf]
        %v258 = vld [vmem:[%s252 + $0x10] sm:$0xf]
        %v259 = vld [vmem:[%s252 + $0x14] sm:$0xf]
        %v260 = vld [vmem:[%s252 + $0x18] sm:$0xf]
        %v261 = vld [vmem:[%s252 + $0x1c] sm:$0xf]
        %v262 = vld [vmem:[%s252 + $0x20] sm:$0xf]
        %v263 = vld [vmem:[%s252 + $0x24] sm:$0xf]
        %v264 = vld [vmem:[%s252 + $0x28] sm:$0xf]
        %v265 = vld [vmem:[%s252 + $0x2c] sm:$0xf]
        %v266 = vld [vmem:[%s252 + $0x30] sm:$0xf]
        %v267 = vld [vmem:[%s252 + $0x34] sm:$0xf]
        %v268 = vld [vmem:[%s252 + $0x38] sm:$0xf]
        %v269 = vld [vmem:[%s252 + $0x3c] sm:$0xf]
        %v270 = vld [vmem:[%s252 + $0x40] sm:$0xf]
        %v271 = vld [vmem:[%s252 + $0x44] sm:$0xf]
        %v272 = vld [vmem:[%s1] sm:$0xf]
        %v273 = vld [vmem:[%s1 + $0x4] sm:$0xf]
        %v274 = vld [vmem:[%s1 + $0x8] sm:$0xf]
        %v275 = vld [vmem:[%s1 + $0xc] sm:$0xf]
        %v276 = vld [vmem:[%s252 + $0x48] sm:$0x1]
        %s277 = scalar_lea.vmem %s1, 16
        %v278 = vld [vmem:[%s277] sm:$0xf]
        %v279 = vld [vmem:[%s277 + $0x4] sm:$0xf]
        %v280 = vld [vmem:[%s277 + $0x8] sm:$0xf]
        %v281 = vld [vmem:[%s277 + $0xc] sm:$0xf]
        %v301 = vunpack.c.l.b16 %v254
        %v302 = vunpack.c.l.b16 %v255
        %v303 = vunpack.c.l.b16 %v256
        %v304 = vunpack.c.l.b16 %v257
        %v305 = vunpack.c.l.b16 %v258
        %v306 = vunpack.c.l.b16 %v259
        %v307 = vunpack.c.l.b16 %v260
        %v308 = vunpack.c.l.b16 %v261
        %v309 = vunpack.c.l.b16 %v262
        %v310 = vunpack.c.l.b16 %v263
        %v311 = vunpack.c.l.b16 %v264
        %v312 = vunpack.c.l.b16 %v265
        %v313 = vunpack.c.l.b16 %v266
        %v314 = vunpack.c.l.b16 %v267
        %v315 = vunpack.c.l.b16 %v268
        %v316 = vunpack.c.l.b16 %v269
        %v317 = vunpack.c.l.b16 %v270
        %v318 = vunpack.c.l.b16 %v271
        %v319 = vunpack.c.l.b16 %v276
        %v320 = vpack.c.b16 %v302, %v301
        %v321 = vpack.c.b16 %v304, %v303
        %v322 = vpack.c.b16 %v306, %v305
        %v323 = vpack.c.b16 %v308, %v307
        %v324 = vpack.c.b16 %v310, %v309
        %v325 = vpack.c.b16 %v312, %v311
        %v326 = vpack.c.b16 %v314, %v313
        %v327 = vpack.c.b16 %v316, %v315
        %v328 = vpack.c.b16 %v318, %v317
        %v329 = vpack.c.b16 %v319, %v319
        %vm330 = vsmask.f32 7424
        %v332 = vshrl.u32 %v320, 16
        %v334 = vshll.u32 %v320, 16
        %v336 = vrot.slane %v334, 1
        %v337 = vor.u32 %v332, %v336
        %v339 = vshll.u32 %v321, 16
        %v341 = vrot.slane %v339, 1
        %v342 = vsel %vm330, %v337, %v341
        %v343 = vshrl.u32 %v321, 16
        %v345 = vor.u32 %v343, %v341
        %v347 = vshll.u32 %v322, 16
        %v349 = vrot.slane %v347, 1
        %v350 = vsel %vm330, %v345, %v349
        %v351 = vshrl.u32 %v322, 16
        %v353 = vor.u32 %v351, %v349
        %v355 = vshll.u32 %v323, 16
        %v357 = vrot.slane %v355, 1
        %v358 = vsel %vm330, %v353, %v357
        %v359 = vshrl.u32 %v323, 16
        %v361 = vor.u32 %v359, %v357
        %v363 = vshll.u32 %v324, 16
        %v365 = vrot.slane %v363, 1
        %v366 = vsel %vm330, %v361, %v365
        %v367 = vshrl.u32 %v324, 16
        %v369 = vor.u32 %v367, %v365
        %v371 = vshll.u32 %v325, 16
        %v373 = vrot.slane %v371, 1
        %v374 = vsel %vm330, %v369, %v373
        %v375 = vshrl.u32 %v325, 16
        %v377 = vor.u32 %v375, %v373
        %v379 = vshll.u32 %v326, 16
        %v381 = vrot.slane %v379, 1
        %v382 = vsel %vm330, %v377, %v381
        %v383 = vshrl.u32 %v326, 16
        %v385 = vor.u32 %v383, %v381
        %v387 = vshll.u32 %v327, 16
        %v389 = vrot.slane %v387, 1
        %v390 = vsel %vm330, %v385, %v389
        %v391 = vshrl.u32 %v327, 16
        %v393 = vor.u32 %v391, %v389
        %v395 = vshll.u32 %v328, 16
        %v397 = vrot.slane %v395, 1
        %v398 = vsel %vm330, %v393, %v397
        %v399 = vshrl.u32 %v328, 16
        %v401 = vor.u32 %v399, %v397
        %v403 = vshll.u32 %v329, 16
        %v405 = vrot.slane %v403, 1
        %v406 = vsel %vm330, %v401, %v405
        %v411 = vunpack.c.l.b16 %v278
        %v412 = vunpack.c.l.b16 %v279
        %v413 = vunpack.c.l.b16 %v280
        %v414 = vunpack.c.l.b16 %v281
        %v415 = vpack.c.b16 %v412, %v411
        %v416 = vpack.c.b16 %v414, %v413
        %vm419 = vcmask 261120
        %v421 = vsel %vm419, %v342, 0
        %v424 = vsel %vm419, %v350, 0
        %v427 = vsel %vm419, %v358, 0
        %v430 = vsel %vm419, %v366, 0
        %v433 = vsel %vm419, %v374, 0
        %v436 = vsel %vm419, %v382, 0
        %v439 = vsel %vm419, %v390, 0
        %v442 = vsel %vm419, %v398, 0
        %v445 = vsel %vm419, %v406, 0
        %447 = vmatprep.subr.bf16.mxu0 0
        %448 = vmatpush1.bf16.msra.mxu0 %v415
        %449 = vmatprep.subr.bf16.mxu0 0
        %450 = vmatpush1.bf16.msra.mxu0 %v416
        %451 = vmatprep.subr.bf16.mxu0 0
        %452 = vmatpush1.bf16.msra.mxu0 0
        %453 = vmatprep.subr.bf16.mxu0 0
        %454 = vmatpush1.bf16.msra.mxu0 0
        %455 = vmatprep.subr.bf16.mxu0 0
        %456 = vmatpush1.bf16.msra.mxu0 0
        %457 = vmatprep.subr.bf16.mxu0 0
        %458 = vmatpush1.bf16.msra.mxu0 0
        %459 = vmatprep.subr.bf16.mxu0 0
        %460 = vmatpush1.bf16.msra.mxu0 0
        %461 = vmatprep.subr.bf16.mxu0 0
        %462 = vmatpush1.bf16.msra.mxu0 0
        %463 = vmatprep.subr.bf16.mxu0 0
        %464 = vmatpush1.bf16.msra.mxu0 0
        %465 = vmatprep.subr.bf16.mxu0 0
        %466 = vmatpush1.bf16.msra.mxu0 0
        %467 = vmatprep.subr.bf16.mxu0 0
        %468 = vmatpush1.bf16.msra.mxu0 0
        %469 = vmatprep.subr.bf16.mxu0 0
        %470 = vmatpush1.bf16.msra.mxu0 0
        %471 = vmatprep.subr.bf16.mxu0 0
        %472 = vmatpush1.bf16.msra.mxu0 0
        %473 = vmatprep.subr.bf16.mxu0 0
        %474 = vmatpush1.bf16.msra.mxu0 0
        %475 = vmatprep.subr.bf16.mxu0 0
        %476 = vmatpush1.bf16.msra.mxu0 0
        %477 = vmatprep.subr.bf16.mxu0 0
        %478 = vmatpush1.bf16.msra.mxu0 0
        %479 = vmatprep.mubr.bf16.mxu0 0
        %480 = vmatmul.mubr.bf16.gmra.mrb[0].mxu0 %v421
        %v481 = vpop.f32.mrb[0].mxu0
        %v482 = vadd.f32 0.0, %v481
        %v483 = vpop.f32.mrb[0].mxu0
        %v484 = vpop.f32.mrb[0].mxu0
        %v485 = vadd.f32 0.0, %v484
        %v486 = vpop.f32.mrb[0].mxu0
        %487 = vmatprep.mubr.bf16.mxu0 0
        %488 = vmatmul.mubr.bf16.gmra.mrb[0].mxu0 %v424
        %v489 = vpop.f32.mrb[0].mxu0
        %v490 = vadd.f32 0.0, %v489
        %v491 = vpop.f32.mrb[0].mxu0
        %v492 = vpop.f32.mrb[0].mxu0
        %v493 = vadd.f32 0.0, %v492
        %v494 = vpop.f32.mrb[0].mxu0
        %495 = vmatprep.mubr.bf16.mxu0 0
        %496 = vmatmul.mubr.bf16.gmra.mrb[0].mxu0 %v427
        %v497 = vpop.f32.mrb[0].mxu0
        %v498 = vadd.f32 0.0, %v497
        %v499 = vpop.f32.mrb[0].mxu0
        %v500 = vpop.f32.mrb[0].mxu0
        %v501 = vadd.f32 0.0, %v500
        %v502 = vpop.f32.mrb[0].mxu0
        %503 = vmatprep.mubr.bf16.mxu0 0
        %504 = vmatmul.mubr.bf16.gmra.mrb[0].mxu0 %v430
        %v505 = vpop.f32.mrb[0].mxu0
        %v506 = vadd.f32 0.0, %v505
        %v507 = vpop.f32.mrb[0].mxu0
        %v508 = vpop.f32.mrb[0].mxu0
        %v509 = vadd.f32 0.0, %v508
        %v510 = vpop.f32.mrb[0].mxu0
        %511 = vmatprep.mubr.bf16.mxu0 0
        %512 = vmatmul.mubr.bf16.gmra.mrb[0].mxu0 %v433
        %v513 = vpop.f32.mrb[0].mxu0
        %v514 = vadd.f32 0.0, %v513
        %v515 = vpop.f32.mrb[0].mxu0
        %v516 = vpop.f32.mrb[0].mxu0
        %v517 = vadd.f32 0.0, %v516
        %v518 = vpop.f32.mrb[0].mxu0
        %519 = vmatprep.mubr.bf16.mxu0 0
        %520 = vmatmul.mubr.bf16.gmra.mrb[0].mxu0 %v436
        %v521 = vpop.f32.mrb[0].mxu0
        %v522 = vadd.f32 0.0, %v521
        %v523 = vpop.f32.mrb[0].mxu0
        %v524 = vpop.f32.mrb[0].mxu0
        %v525 = vadd.f32 0.0, %v524
        %v526 = vpop.f32.mrb[0].mxu0
        %527 = vmatprep.mubr.bf16.mxu0 0
        %528 = vmatmul.mubr.bf16.gmra.mrb[0].mxu0 %v439
        %v529 = vpop.f32.mrb[0].mxu0
        %v530 = vadd.f32 0.0, %v529
        %v531 = vpop.f32.mrb[0].mxu0
        %v532 = vpop.f32.mrb[0].mxu0
        %v533 = vadd.f32 0.0, %v532
        %v534 = vpop.f32.mrb[0].mxu0
        %535 = vmatprep.mubr.bf16.mxu0 0
        %536 = vmatmul.mubr.bf16.gmra.mrb[0].mxu0 %v442
        %v537 = vpop.f32.mrb[0].mxu0
        %v538 = vadd.f32 0.0, %v537
        %v539 = vpop.f32.mrb[0].mxu0
        %v540 = vpop.f32.mrb[0].mxu0
        %v541 = vadd.f32 0.0, %v540
        %v542 = vpop.f32.mrb[0].mxu0
        %543 = vmatprep.mubr.bf16.mxu0 0
        %544 = vmatmul.mubr.bf16.gmra.mrb[0].mxu0 %v445
        %v545 = vpop.f32.mrb[0].mxu0
        %v546 = vadd.f32 0.0, %v545
        %v547 = vpop.f32.mrb[0].mxu0
        %v548 = vpop.f32.mrb[0].mxu0
        %v549 = vadd.f32 0.0, %v548
        %v550 = vpop.f32.mrb[0].mxu0
        %551 = vdwg.mxu0
        %v556 = vunpack.c.l.b16 %v272
        %v557 = vunpack.c.l.b16 %v273
        %v558 = vunpack.c.l.b16 %v274
        %v559 = vunpack.c.l.b16 %v275
        %v560 = vpack.c.b16 %v557, %v556
        %v561 = vpack.c.b16 %v559, %v558
        %v564 = vsel %vm419, %v320, 0
        %v566 = vsel %vm419, %v321, 0
        %v568 = vsel %vm419, %v322, 0
        %v570 = vsel %vm419, %v323, 0
        %v572 = vsel %vm419, %v324, 0
        %v574 = vsel %vm419, %v325, 0
        %v576 = vsel %vm419, %v326, 0
        %v578 = vsel %vm419, %v327, 0
        %v580 = vsel %vm419, %v328, 0
        %582 = vmatprep.subr.bf16.mxu0 0
        %583 = vmatpush1.bf16.msra.mxu0 %v560
        %584 = vmatprep.subr.bf16.mxu0 0
        %585 = vmatpush1.bf16.msra.mxu0 %v561
        %586 = vmatprep.subr.bf16.mxu0 0
        %587 = vmatpush1.bf16.msra.mxu0 0
        %588 = vmatprep.subr.bf16.mxu0 0
        %589 = vmatpush1.bf16.msra.mxu0 0
        %590 = vmatprep.subr.bf16.mxu0 0
        %591 = vmatpush1.bf16.msra.mxu0 0
        %592 = vmatprep.subr.bf16.mxu0 0
        %593 = vmatpush1.bf16.msra.mxu0 0
        %594 = vmatprep.subr.bf16.mxu0 0
        %595 = vmatpush1.bf16.msra.mxu0 0
        %596 = vmatprep.subr.bf16.mxu0 0
        %597 = vmatpush1.bf16.msra.mxu0 0
        %598 = vmatprep.subr.bf16.mxu0 0
        %599 = vmatpush1.bf16.msra.mxu0 0
        %600 = vmatprep.subr.bf16.mxu0 0
        %601 = vmatpush1.bf16.msra.mxu0 0
        %602 = vmatprep.subr.bf16.mxu0 0
        %603 = vmatpush1.bf16.msra.mxu0 0
        %604 = vmatprep.subr.bf16.mxu0 0
        %605 = vmatpush1.bf16.msra.mxu0 0
        %606 = vmatprep.subr.bf16.mxu0 0
        %607 = vmatpush1.bf16.msra.mxu0 0
        %608 = vmatprep.subr.bf16.mxu0 0
        %609 = vmatpush1.bf16.msra.mxu0 0
        %610 = vmatprep.subr.bf16.mxu0 0
        %611 = vmatpush1.bf16.msra.mxu0 0
        %612 = vmatprep.subr.bf16.mxu0 0
        %613 = vmatpush1.bf16.msra.mxu0 0
        %614 = vmatprep.mubr.bf16.mxu0 0
        %615 = vmatmul.mubr.bf16.gmra.mrb[0].mxu0 %v564
        %v616 = vpop.f32.mrb[0].mxu0
        %v617 = vadd.f32 %v482, %v616
        %v618 = vpop.f32.mrb[0].mxu0
        %v619 = vpop.f32.mrb[0].mxu0
        %v620 = vadd.f32 %v485, %v619
        %v621 = vpop.f32.mrb[0].mxu0
        %622 = vmatprep.mubr.bf16.mxu0 0
        %623 = vmatmul.mubr.bf16.gmra.mrb[0].mxu0 %v566
        %v624 = vpop.f32.mrb[0].mxu0
        %v625 = vadd.f32 %v490, %v624
        %v626 = vpop.f32.mrb[0].mxu0
        %v627 = vpop.f32.mrb[0].mxu0
        %v628 = vadd.f32 %v493, %v627
        %v629 = vpop.f32.mrb[0].mxu0
        %630 = vmatprep.mubr.bf16.mxu0 0
        %631 = vmatmul.mubr.bf16.gmra.mrb[0].mxu0 %v568
        %v632 = vpop.f32.mrb[0].mxu0
        %v633 = vadd.f32 %v498, %v632
        %v634 = vpop.f32.mrb[0].mxu0
        %v635 = vpop.f32.mrb[0].mxu0
        %v636 = vadd.f32 %v501, %v635
        %v637 = vpop.f32.mrb[0].mxu0
        %638 = vmatprep.mubr.bf16.mxu0 0
        %639 = vmatmul.mubr.bf16.gmra.mrb[0].mxu0 %v570
        %v640 = vpop.f32.mrb[0].mxu0
        %v641 = vadd.f32 %v506, %v640
        %v642 = vpop.f32.mrb[0].mxu0
        %v643 = vpop.f32.mrb[0].mxu0
        %v644 = vadd.f32 %v509, %v643
        %v645 = vpop.f32.mrb[0].mxu0
        %646 = vmatprep.mubr.bf16.mxu0 0
        %647 = vmatmul.mubr.bf16.gmra.mrb[0].mxu0 %v572
        %v648 = vpop.f32.mrb[0].mxu0
        %v649 = vadd.f32 %v514, %v648
        %v650 = vpop.f32.mrb[0].mxu0
        %v651 = vpop.f32.mrb[0].mxu0
        %v652 = vadd.f32 %v517, %v651
        %v653 = vpop.f32.mrb[0].mxu0
        %654 = vmatprep.mubr.bf16.mxu0 0
        %655 = vmatmul.mubr.bf16.gmra.mrb[0].mxu0 %v574
        %v656 = vpop.f32.mrb[0].mxu0
        %v657 = vadd.f32 %v522, %v656
        %v658 = vpop.f32.mrb[0].mxu0
        %v659 = vpop.f32.mrb[0].mxu0
        %v660 = vadd.f32 %v525, %v659
        %v661 = vpop.f32.mrb[0].mxu0
        %662 = vmatprep.mubr.bf16.mxu0 0
        %663 = vmatmul.mubr.bf16.gmra.mrb[0].mxu0 %v576
        %v664 = vpop.f32.mrb[0].mxu0
        %v665 = vadd.f32 %v530, %v664
        %v666 = vpop.f32.mrb[0].mxu0
        %v667 = vpop.f32.mrb[0].mxu0
        %v668 = vadd.f32 %v533, %v667
        %v669 = vpop.f32.mrb[0].mxu0
        %670 = vmatprep.mubr.bf16.mxu0 0
        %671 = vmatmul.mubr.bf16.gmra.mrb[0].mxu0 %v578
        %v672 = vpop.f32.mrb[0].mxu0
        %v673 = vadd.f32 %v538, %v672
        %v674 = vpop.f32.mrb[0].mxu0
        %v675 = vpop.f32.mrb[0].mxu0
        %v676 = vadd.f32 %v541, %v675
        %v677 = vpop.f32.mrb[0].mxu0
        %678 = vmatprep.mubr.bf16.mxu0 0
        %679 = vmatmul.mubr.bf16.gmra.mrb[0].mxu0 %v580
        %v680 = vpop.f32.mrb[0].mxu0
        %v681 = vadd.f32 %v546, %v680
        %v682 = vpop.f32.mrb[0].mxu0
        %v683 = vpop.f32.mrb[0].mxu0
        %v684 = vadd.f32 %v549, %v683
        %v685 = vpop.f32.mrb[0].mxu0
        %686 = vdwg.mxu0
        %v687 = vld [vmem:[%s252] sm:$0xe]
        %s688 = scalar_lea.vmem %s1, 32
        %v689 = vld [vmem:[%s688] sm:$0xf]
        %v690 = vld [vmem:[%s688 + $0x4] sm:$0xf]
        %v691 = vld [vmem:[%s688 + $0x8] sm:$0xf]
        %v692 = vld [vmem:[%s688 + $0xc] sm:$0xf]
        %v694 = vunpack.c.l.b16 %v687
        %v695 = vpack.c.b16 %v302, %v694
        %vm696 = vcmask 1046528
        %v697 = vrot.slane %v695, 1
        %v698 = vrot.slane %v321, 1
        %v699 = vsel %vm696, %v697, %v698
        %v700 = vrot.slane %v322, 1
        %v701 = vsel %vm696, %v698, %v700
        %v702 = vrot.slane %v323, 1
        %v703 = vsel %vm696, %v700, %v702
        %v704 = vrot.slane %v324, 1
        %v705 = vsel %vm696, %v702, %v704
        %v706 = vrot.slane %v325, 1
        %v707 = vsel %vm696, %v704, %v706
        %v708 = vrot.slane %v326, 1
        %v709 = vsel %vm696, %v706, %v708
        %v710 = vrot.slane %v327, 1
        %v711 = vsel %vm696, %v708, %v710
        %v712 = vrot.slane %v328, 1
        %v713 = vsel %vm696, %v710, %v712
        %v714 = vrot.slane %v329, 1
        %v715 = vsel %vm696, %v712, %v714
        %v720 = vunpack.c.l.b16 %v689
        %v721 = vunpack.c.l.b16 %v690
        %v722 = vunpack.c.l.b16 %v691
        %v723 = vunpack.c.l.b16 %v692
        %v724 = vpack.c.b16 %v721, %v720
        %v725 = vpack.c.b16 %v723, %v722
        %v729 = vsel %vm419, %v699, 0
        %v732 = vsel %vm419, %v701, 0
        %v735 = vsel %vm419, %v703, 0
        %v738 = vsel %vm419, %v705, 0
        %v741 = vsel %vm419, %v707, 0
        %v744 = vsel %vm419, %v709, 0
        %v747 = vsel %vm419, %v711, 0
        %v750 = vsel %vm419, %v713, 0
        %v753 = vsel %vm419, %v715, 0
        %755 = vmatprep.subr.bf16.mxu0 0
        %756 = vmatpush1.bf16.msra.mxu0 %v724
        %757 = vmatprep.subr.bf16.mxu0 0
        %758 = vmatpush1.bf16.msra.mxu0 %v725
        %759 = vmatprep.subr.bf16.mxu0 0
        %760 = vmatpush1.bf16.msra.mxu0 0
        %761 = vmatprep.subr.bf16.mxu0 0
        %762 = vmatpush1.bf16.msra.mxu0 0
        %763 = vmatprep.subr.bf16.mxu0 0
        %764 = vmatpush1.bf16.msra.mxu0 0
        %765 = vmatprep.subr.bf16.mxu0 0
        %766 = vmatpush1.bf16.msra.mxu0 0
        %767 = vmatprep.subr.bf16.mxu0 0
        %768 = vmatpush1.bf16.msra.mxu0 0
        %769 = vmatprep.subr.bf16.mxu0 0
        %770 = vmatpush1.bf16.msra.mxu0 0
        %771 = vmatprep.subr.bf16.mxu0 0
        %772 = vmatpush1.bf16.msra.mxu0 0
        %773 = vmatprep.subr.bf16.mxu0 0
        %774 = vmatpush1.bf16.msra.mxu0 0
        %775 = vmatprep.subr.bf16.mxu0 0
        %776 = vmatpush1.bf16.msra.mxu0 0
        %777 = vmatprep.subr.bf16.mxu0 0
        %778 = vmatpush1.bf16.msra.mxu0 0
        %779 = vmatprep.subr.bf16.mxu0 0
        %780 = vmatpush1.bf16.msra.mxu0 0
        %781 = vmatprep.subr.bf16.mxu0 0
        %782 = vmatpush1.bf16.msra.mxu0 0
        %783 = vmatprep.subr.bf16.mxu0 0
        %784 = vmatpush1.bf16.msra.mxu0 0
        %785 = vmatprep.subr.bf16.mxu0 0
        %786 = vmatpush1.bf16.msra.mxu0 0
        %787 = vmatprep.mubr.bf16.mxu0 0
        %788 = vmatmul.mubr.bf16.gmra.mrb[0].mxu0 %v729
        %v789 = vpop.f32.mrb[0].mxu0
        %v790 = vadd.f32 0.0, %v789
        %v791 = vpop.f32.mrb[0].mxu0
        %v792 = vpop.f32.mrb[0].mxu0
        %v793 = vadd.f32 0.0, %v792
        %v794 = vpop.f32.mrb[0].mxu0
        %795 = vmatprep.mubr.bf16.mxu0 0
        %796 = vmatmul.mubr.bf16.gmra.mrb[0].mxu0 %v732
        %v797 = vpop.f32.mrb[0].mxu0
        %v798 = vadd.f32 0.0, %v797
        %v799 = vpop.f32.mrb[0].mxu0
        %v800 = vpop.f32.mrb[0].mxu0
        %v801 = vadd.f32 0.0, %v800
        %v802 = vpop.f32.mrb[0].mxu0
        %803 = vmatprep.mubr.bf16.mxu0 0
        %804 = vmatmul.mubr.bf16.gmra.mrb[0].mxu0 %v735
        %v805 = vpop.f32.mrb[0].mxu0
        %v806 = vadd.f32 0.0, %v805
        %v807 = vpop.f32.mrb[0].mxu0
        %v808 = vpop.f32.mrb[0].mxu0
        %v809 = vadd.f32 0.0, %v808
        %v810 = vpop.f32.mrb[0].mxu0
        %811 = vmatprep.mubr.bf16.mxu0 0
        %812 = vmatmul.mubr.bf16.gmra.mrb[0].mxu0 %v738
        %v813 = vpop.f32.mrb[0].mxu0
        %v814 = vadd.f32 0.0, %v813
        %v815 = vpop.f32.mrb[0].mxu0
        %v816 = vpop.f32.mrb[0].mxu0
        %v817 = vadd.f32 0.0, %v816
        %v818 = vpop.f32.mrb[0].mxu0
        %819 = vmatprep.mubr.bf16.mxu0 0
        %820 = vmatmul.mubr.bf16.gmra.mrb[0].mxu0 %v741
        %v821 = vpop.f32.mrb[0].mxu0
        %v822 = vadd.f32 0.0, %v821
        %v823 = vpop.f32.mrb[0].mxu0
        %v824 = vpop.f32.mrb[0].mxu0
        %v825 = vadd.f32 0.0, %v824
        %v826 = vpop.f32.mrb[0].mxu0
        %827 = vmatprep.mubr.bf16.mxu0 0
        %828 = vmatmul.mubr.bf16.gmra.mrb[0].mxu0 %v744
        %v829 = vpop.f32.mrb[0].mxu0
        %v830 = vadd.f32 0.0, %v829
        %v831 = vpop.f32.mrb[0].mxu0
        %v832 = vpop.f32.mrb[0].mxu0
        %v833 = vadd.f32 0.0, %v832
        %v834 = vpop.f32.mrb[0].mxu0
        %835 = vmatprep.mubr.bf16.mxu0 0
        %836 = vmatmul.mubr.bf16.gmra.mrb[0].mxu0 %v747
        %v837 = vpop.f32.mrb[0].mxu0
        %v838 = vadd.f32 0.0, %v837
        %v839 = vpop.f32.mrb[0].mxu0
        %v840 = vpop.f32.mrb[0].mxu0
        %v841 = vadd.f32 0.0, %v840
        %v842 = vpop.f32.mrb[0].mxu0
        %843 = vmatprep.mubr.bf16.mxu0 0
        %844 = vmatmul.mubr.bf16.gmra.mrb[0].mxu0 %v750
        %v845 = vpop.f32.mrb[0].mxu0
        %v846 = vadd.f32 0.0, %v845
        %v847 = vpop.f32.mrb[0].mxu0
        %v848 = vpop.f32.mrb[0].mxu0
        %v849 = vadd.f32 0.0, %v848
        %v850 = vpop.f32.mrb[0].mxu0
        %851 = vmatprep.mubr.bf16.mxu0 0
        %852 = vmatmul.mubr.bf16.gmra.mrb[0].mxu0 %v753
        %v853 = vpop.f32.mrb[0].mxu0
        %v854 = vadd.f32 0.0, %v853
        %v855 = vpop.f32.mrb[0].mxu0
        %v856 = vpop.f32.mrb[0].mxu0
        %v857 = vadd.f32 0.0, %v856
        %v858 = vpop.f32.mrb[0].mxu0
        %859 = vdwg.mxu0
        %v860 = vadd.f32 %v617, %v790
        %v861 = vadd.f32 %v620, %v793
        %v862 = vadd.f32 %v625, %v798
        %v863 = vadd.f32 %v628, %v801
        %v864 = vadd.f32 %v633, %v806
        %v865 = vadd.f32 %v636, %v809
        %v866 = vadd.f32 %v641, %v814
        %v867 = vadd.f32 %v644, %v817
        %v868 = vadd.f32 %v649, %v822
        %v869 = vadd.f32 %v652, %v825
        %v870 = vadd.f32 %v657, %v830
        %v871 = vadd.f32 %v660, %v833
        %v872 = vadd.f32 %v665, %v838
        %v873 = vadd.f32 %v668, %v841
        %v874 = vadd.f32 %v673, %v846
        %v875 = vadd.f32 %v676, %v849
        %v876 = vadd.f32 %v681, %v854
        %v877 = vadd.f32 %v684, %v857
        %v878 = vld [vmem:[%s252 + $0x8] sm:$0xe]
        %v879 = vld [vmem:[%s252 + $0xc] sm:$0xf]
        %v880 = vld [vmem:[%s252 + $0x10] sm:$0xf]
        %v881 = vld [vmem:[%s252 + $0x14] sm:$0xf]
        %v882 = vld [vmem:[%s252 + $0x18] sm:$0xf]
        %v883 = vld [vmem:[%s252 + $0x1c] sm:$0xf]
        %v884 = vld [vmem:[%s252 + $0x20] sm:$0xf]
        %v885 = vld [vmem:[%s252 + $0x24] sm:$0xf]
        %v886 = vld [vmem:[%s252 + $0x28] sm:$0xf]
        %v887 = vld [vmem:[%s252 + $0x2c] sm:$0xf]
        %v888 = vld [vmem:[%s252 + $0x30] sm:$0xf]
        %v889 = vld [vmem:[%s252 + $0x34] sm:$0xf]
        %v890 = vld [vmem:[%s252 + $0x38] sm:$0xf]
        %v891 = vld [vmem:[%s252 + $0x3c] sm:$0xf]
        %v892 = vld [vmem:[%s252 + $0x40] sm:$0xf]
        %v893 = vld [vmem:[%s252 + $0x44] sm:$0xf]
        %v894 = vld [vmem:[%s252 + $0x48] sm:$0xf]
        %v895 = vld [vmem:[%s252 + $0x4c] sm:$0xf]
        %v896 = vld [vmem:[%s252 + $0x50] sm:$0x1]
        %s897 = scalar_lea.vmem %s1, 48
        %v898 = vld [vmem:[%s897] sm:$0xf]
        %v899 = vld [vmem:[%s897 + $0x4] sm:$0xf]
        %v900 = vld [vmem:[%s897 + $0x8] sm:$0xf]
        %v901 = vld [vmem:[%s897 + $0xc] sm:$0xf]
        %v921 = vunpack.c.l.b16 %v878
        %v922 = vunpack.c.l.b16 %v879
        %v923 = vunpack.c.l.b16 %v880
        %v924 = vunpack.c.l.b16 %v881
        %v925 = vunpack.c.l.b16 %v882
        %v926 = vunpack.c.l.b16 %v883
        %v927 = vunpack.c.l.b16 %v884
        %v928 = vunpack.c.l.b16 %v885
        %v929 = vunpack.c.l.b16 %v886
        %v930 = vunpack.c.l.b16 %v887
        %v931 = vunpack.c.l.b16 %v888
        %v932 = vunpack.c.l.b16 %v889
        %v933 = vunpack.c.l.b16 %v890
        %v934 = vunpack.c.l.b16 %v891
        %v935 = vunpack.c.l.b16 %v892
        %v936 = vunpack.c.l.b16 %v893
        %v937 = vunpack.c.l.b16 %v894
        %v938 = vunpack.c.l.b16 %v895
        %v939 = vunpack.c.l.b16 %v896
        %v940 = vpack.c.b16 %v922, %v921
        %v941 = vpack.c.b16 %v924, %v923
        %v942 = vpack.c.b16 %v926, %v925
        %v943 = vpack.c.b16 %v928, %v927
        %v944 = vpack.c.b16 %v930, %v929
        %v945 = vpack.c.b16 %v932, %v931
        %v946 = vpack.c.b16 %v934, %v933
        %v947 = vpack.c.b16 %v936, %v935
        %v948 = vpack.c.b16 %v938, %v937
        %v949 = vpack.c.b16 %v939, %v939
        %v950 = vrot.slane %v940, 1
        %v951 = vrot.slane %v941, 1
        %v952 = vsel %vm696, %v950, %v951
        %v953 = vrot.slane %v942, 1
        %v954 = vsel %vm696, %v951, %v953
        %v955 = vrot.slane %v943, 1
        %v956 = vsel %vm696, %v953, %v955
        %v957 = vrot.slane %v944, 1
        %v958 = vsel %vm696, %v955, %v957
        %v959 = vrot.slane %v945, 1
        %v960 = vsel %vm696, %v957, %v959
        %v961 = vrot.slane %v946, 1
        %v962 = vsel %vm696, %v959, %v961
        %v963 = vrot.slane %v947, 1
        %v964 = vsel %vm696, %v961, %v963
        %v965 = vrot.slane %v948, 1
        %v966 = vsel %vm696, %v963, %v965
        %v967 = vrot.slane %v949, 1
        %v968 = vsel %vm696, %v965, %v967
        %v973 = vunpack.c.l.b16 %v898
        %v974 = vunpack.c.l.b16 %v899
        %v975 = vunpack.c.l.b16 %v900
        %v976 = vunpack.c.l.b16 %v901
        %v977 = vpack.c.b16 %v974, %v973
        %v978 = vpack.c.b16 %v976, %v975
        %v982 = vsel %vm419, %v952, 0
        %v985 = vsel %vm419, %v954, 0
        %v988 = vsel %vm419, %v956, 0
        %v991 = vsel %vm419, %v958, 0
        %v994 = vsel %vm419, %v960, 0
        %v997 = vsel %vm419, %v962, 0
        %v1000 = vsel %vm419, %v964, 0
        %v1003 = vsel %vm419, %v966, 0
        %v1006 = vsel %vm419, %v968, 0
        %1008 = vmatprep.subr.bf16.mxu0 0
        %1009 = vmatpush1.bf16.msra.mxu0 %v977
        %1010 = vmatprep.subr.bf16.mxu0 0
        %1011 = vmatpush1.bf16.msra.mxu0 %v978
        %1012 = vmatprep.subr.bf16.mxu0 0
        %1013 = vmatpush1.bf16.msra.mxu0 0
        %1014 = vmatprep.subr.bf16.mxu0 0
        %1015 = vmatpush1.bf16.msra.mxu0 0
        %1016 = vmatprep.subr.bf16.mxu0 0
        %1017 = vmatpush1.bf16.msra.mxu0 0
        %1018 = vmatprep.subr.bf16.mxu0 0
        %1019 = vmatpush1.bf16.msra.mxu0 0
        %1020 = vmatprep.subr.bf16.mxu0 0
        %1021 = vmatpush1.bf16.msra.mxu0 0
        %1022 = vmatprep.subr.bf16.mxu0 0
        %1023 = vmatpush1.bf16.msra.mxu0 0
        %1024 = vmatprep.subr.bf16.mxu0 0
        %1025 = vmatpush1.bf16.msra.mxu0 0
        %1026 = vmatprep.subr.bf16.mxu0 0
        %1027 = vmatpush1.bf16.msra.mxu0 0
        %1028 = vmatprep.subr.bf16.mxu0 0
        %1029 = vmatpush1.bf16.msra.mxu0 0
        %1030 = vmatprep.subr.bf16.mxu0 0
        %1031 = vmatpush1.bf16.msra.mxu0 0
        %1032 = vmatprep.subr.bf16.mxu0 0
        %1033 = vmatpush1.bf16.msra.mxu0 0
        %1034 = vmatprep.subr.bf16.mxu0 0
        %1035 = vmatpush1.bf16.msra.mxu0 0
        %1036 = vmatprep.subr.bf16.mxu0 0
        %1037 = vmatpush1.bf16.msra.mxu0 0
        %1038 = vmatprep.subr.bf16.mxu0 0
        %1039 = vmatpush1.bf16.msra.mxu0 0
        %1040 = vmatprep.mubr.bf16.mxu0 0
        %1041 = vmatmul.mubr.bf16.gmra.mrb[0].mxu0 %v982
        %v1042 = vpop.f32.mrb[0].mxu0
        %v1043 = vadd.f32 0.0, %v1042
        %v1044 = vpop.f32.mrb[0].mxu0
        %v1045 = vpop.f32.mrb[0].mxu0
        %v1046 = vadd.f32 0.0, %v1045
        %v1047 = vpop.f32.mrb[0].mxu0
        %1048 = vmatprep.mubr.bf16.mxu0 0
        %1049 = vmatmul.mubr.bf16.gmra.mrb[0].mxu0 %v985
        %v1050 = vpop.f32.mrb[0].mxu0
        %v1051 = vadd.f32 0.0, %v1050
        %v1052 = vpop.f32.mrb[0].mxu0
        %v1053 = vpop.f32.mrb[0].mxu0
        %v1054 = vadd.f32 0.0, %v1053
        %v1055 = vpop.f32.mrb[0].mxu0
        %1056 = vmatprep.mubr.bf16.mxu0 0
        %1057 = vmatmul.mubr.bf16.gmra.mrb[0].mxu0 %v988
        %v1058 = vpop.f32.mrb[0].mxu0
        %v1059 = vadd.f32 0.0, %v1058
        %v1060 = vpop.f32.mrb[0].mxu0
        %v1061 = vpop.f32.mrb[0].mxu0
        %v1062 = vadd.f32 0.0, %v1061
        %v1063 = vpop.f32.mrb[0].mxu0
        %1064 = vmatprep.mubr.bf16.mxu0 0
        %1065 = vmatmul.mubr.bf16.gmra.mrb[0].mxu0 %v991
        %v1066 = vpop.f32.mrb[0].mxu0
        %v1067 = vadd.f32 0.0, %v1066
        %v1068 = vpop.f32.mrb[0].mxu0
        %v1069 = vpop.f32.mrb[0].mxu0
        %v1070 = vadd.f32 0.0, %v1069
        %v1071 = vpop.f32.mrb[0].mxu0
        %1072 = vmatprep.mubr.bf16.mxu0 0
        %1073 = vmatmul.mubr.bf16.gmra.mrb[0].mxu0 %v994
        %v1074 = vpop.f32.mrb[0].mxu0
        %v1075 = vadd.f32 0.0, %v1074
        %v1076 = vpop.f32.mrb[0].mxu0
        %v1077 = vpop.f32.mrb[0].mxu0
        %v1078 = vadd.f32 0.0, %v1077
        %v1079 = vpop.f32.mrb[0].mxu0
        %1080 = vmatprep.mubr.bf16.mxu0 0
        %1081 = vmatmul.mubr.bf16.gmra.mrb[0].mxu0 %v997
        %v1082 = vpop.f32.mrb[0].mxu0
        %v1083 = vadd.f32 0.0, %v1082
        %v1084 = vpop.f32.mrb[0].mxu0
        %v1085 = vpop.f32.mrb[0].mxu0
        %v1086 = vadd.f32 0.0, %v1085
        %v1087 = vpop.f32.mrb[0].mxu0
        %1088 = vmatprep.mubr.bf16.mxu0 0
        %1089 = vmatmul.mubr.bf16.gmra.mrb[0].mxu0 %v1000
        %v1090 = vpop.f32.mrb[0].mxu0
        %v1091 = vadd.f32 0.0, %v1090
        %v1092 = vpop.f32.mrb[0].mxu0
        %v1093 = vpop.f32.mrb[0].mxu0
        %v1094 = vadd.f32 0.0, %v1093
        %v1095 = vpop.f32.mrb[0].mxu0
        %1096 = vmatprep.mubr.bf16.mxu0 0
        %1097 = vmatmul.mubr.bf16.gmra.mrb[0].mxu0 %v1003
        %v1098 = vpop.f32.mrb[0].mxu0
        %v1099 = vadd.f32 0.0, %v1098
        %v1100 = vpop.f32.mrb[0].mxu0
        %v1101 = vpop.f32.mrb[0].mxu0
        %v1102 = vadd.f32 0.0, %v1101
        %v1103 = vpop.f32.mrb[0].mxu0
        %1104 = vmatprep.mubr.bf16.mxu0 0
        %1105 = vmatmul.mubr.bf16.gmra.mrb[0].mxu0 %v1006
        %v1106 = vpop.f32.mrb[0].mxu0
        %v1107 = vadd.f32 0.0, %v1106
        %v1108 = vpop.f32.mrb[0].mxu0
        %v1109 = vpop.f32.mrb[0].mxu0
        %v1110 = vadd.f32 0.0, %v1109
        %v1111 = vpop.f32.mrb[0].mxu0
        %1112 = vdwg.mxu0
        %v1113 = vadd.f32 %v860, %v1043
        %v1114 = vadd.f32 %v861, %v1046
        %v1115 = vadd.f32 %v862, %v1051
        %v1116 = vadd.f32 %v863, %v1054
        %v1117 = vadd.f32 %v864, %v1059
        %v1118 = vadd.f32 %v865, %v1062
        %v1119 = vadd.f32 %v866, %v1067
        %v1120 = vadd.f32 %v867, %v1070
        %v1121 = vadd.f32 %v868, %v1075
        %v1122 = vadd.f32 %v869, %v1078
        %v1123 = vadd.f32 %v870, %v1083
        %v1124 = vadd.f32 %v871, %v1086
        %v1125 = vadd.f32 %v872, %v1091
        %v1126 = vadd.f32 %v873, %v1094
        %v1127 = vadd.f32 %v874, %v1099
        %v1128 = vadd.f32 %v875, %v1102
        %v1129 = vadd.f32 %v876, %v1107
        %v1130 = vadd.f32 %v877, %v1110
        %v1131 = vld [vmem:[%s252 + $0x50] sm:$0x3]
        %s1132 = scalar_lea.vmem %s1, 64
        %v1133 = vld [vmem:[%s1132] sm:$0xf]
        %v1134 = vld [vmem:[%s1132 + $0x4] sm:$0xf]
        %v1135 = vld [vmem:[%s1132 + $0x8] sm:$0xf]
        %v1136 = vld [vmem:[%s1132 + $0xc] sm:$0xf]
        %v1138 = vunpack.c.l.b16 %v1131
        %v1139 = vpack.c.b16 %v1138, %v1138
        %vm1140 = vsmask.f32 6400
        %v1142 = vshrl.u32 %v940, 16
        %v1144 = vrot.slane %v1142, 1
        %v1145 = vshll.u32 %v940, 16
        %v1147 = vrot.slane %v1145, 2
        %v1148 = vor.u32 %v1144, %v1147
        %v1150 = vshrl.u32 %v941, 16
        %v1152 = vrot.slane %v1150, 1
        %v1153 = vshll.u32 %v941, 16
        %v1155 = vrot.slane %v1153, 2
        %v1156 = vor.u32 %v1152, %v1155
        %v1157 = vsel %vm1140, %v1148, %v1156
        %v1159 = vshrl.u32 %v942, 16
        %v1161 = vrot.slane %v1159, 1
        %v1162 = vshll.u32 %v942, 16
        %v1164 = vrot.slane %v1162, 2
        %v1165 = vor.u32 %v1161, %v1164
        %v1166 = vsel %vm1140, %v1156, %v1165
        %v1168 = vshrl.u32 %v943, 16
        %v1170 = vrot.slane %v1168, 1
        %v1171 = vshll.u32 %v943, 16
        %v1173 = vrot.slane %v1171, 2
        %v1174 = vor.u32 %v1170, %v1173
        %v1175 = vsel %vm1140, %v1165, %v1174
        %v1177 = vshrl.u32 %v944, 16
        %v1179 = vrot.slane %v1177, 1
        %v1180 = vshll.u32 %v944, 16
        %v1182 = vrot.slane %v1180, 2
        %v1183 = vor.u32 %v1179, %v1182
        %v1184 = vsel %vm1140, %v1174, %v1183
        %v1186 = vshrl.u32 %v945, 16
        %v1188 = vrot.slane %v1186, 1
        %v1189 = vshll.u32 %v945, 16
        %v1191 = vrot.slane %v1189, 2
        %v1192 = vor.u32 %v1188, %v1191
        %v1193 = vsel %vm1140, %v1183, %v1192
        %v1195 = vshrl.u32 %v946, 16
        %v1197 = vrot.slane %v1195, 1
        %v1198 = vshll.u32 %v946, 16
        %v1200 = vrot.slane %v1198, 2
        %v1201 = vor.u32 %v1197, %v1200
        %v1202 = vsel %vm1140, %v1192, %v1201
        %v1204 = vshrl.u32 %v947, 16
        %v1206 = vrot.slane %v1204, 1
        %v1207 = vshll.u32 %v947, 16
        %v1209 = vrot.slane %v1207, 2
        %v1210 = vor.u32 %v1206, %v1209
        %v1211 = vsel %vm1140, %v1201, %v1210
        %v1213 = vshrl.u32 %v948, 16
        %v1215 = vrot.slane %v1213, 1
        %v1216 = vshll.u32 %v948, 16
        %v1218 = vrot.slane %v1216, 2
        %v1219 = vor.u32 %v1215, %v1218
        %v1220 = vsel %vm1140, %v1210, %v1219
        %v1222 = vshrl.u32 %v1139, 16
        %v1224 = vrot.slane %v1222, 1
        %v1225 = vshll.u32 %v1139, 16
        %v1227 = vrot.slane %v1225, 2
        %v1228 = vor.u32 %v1224, %v1227
        %v1229 = vsel %vm1140, %v1219, %v1228
        %v1234 = vunpack.c.l.b16 %v1133
        %v1235 = vunpack.c.l.b16 %v1134
        %v1236 = vunpack.c.l.b16 %v1135
        %v1237 = vunpack.c.l.b16 %v1136
        %v1238 = vpack.c.b16 %v1235, %v1234
        %v1239 = vpack.c.b16 %v1237, %v1236
        %v1243 = vsel %vm419, %v1157, 0
        %v1246 = vsel %vm419, %v1166, 0
        %v1249 = vsel %vm419, %v1175, 0
        %v1252 = vsel %vm419, %v1184, 0
        %v1255 = vsel %vm419, %v1193, 0
        %v1258 = vsel %vm419, %v1202, 0
        %v1261 = vsel %vm419, %v1211, 0
        %v1264 = vsel %vm419, %v1220, 0
        %v1267 = vsel %vm419, %v1229, 0
        %1269 = vmatprep.subr.bf16.mxu0 0
        %1270 = vmatpush1.bf16.msra.mxu0 %v1238
        %1271 = vmatprep.subr.bf16.mxu0 0
        %1272 = vmatpush1.bf16.msra.mxu0 %v1239
        %1273 = vmatprep.subr.bf16.mxu0 0
        %1274 = vmatpush1.bf16.msra.mxu0 0
        %1275 = vmatprep.subr.bf16.mxu0 0
        %1276 = vmatpush1.bf16.msra.mxu0 0
        %1277 = vmatprep.subr.bf16.mxu0 0
        %1278 = vmatpush1.bf16.msra.mxu0 0
        %1279 = vmatprep.subr.bf16.mxu0 0
        %1280 = vmatpush1.bf16.msra.mxu0 0
        %1281 = vmatprep.subr.bf16.mxu0 0
        %1282 = vmatpush1.bf16.msra.mxu0 0
        %1283 = vmatprep.subr.bf16.mxu0 0
        %1284 = vmatpush1.bf16.msra.mxu0 0
        %1285 = vmatprep.subr.bf16.mxu0 0
        %1286 = vmatpush1.bf16.msra.mxu0 0
        %1287 = vmatprep.subr.bf16.mxu0 0
        %1288 = vmatpush1.bf16.msra.mxu0 0
        %1289 = vmatprep.subr.bf16.mxu0 0
        %1290 = vmatpush1.bf16.msra.mxu0 0
        %1291 = vmatprep.subr.bf16.mxu0 0
        %1292 = vmatpush1.bf16.msra.mxu0 0
        %1293 = vmatprep.subr.bf16.mxu0 0
        %1294 = vmatpush1.bf16.msra.mxu0 0
        %1295 = vmatprep.subr.bf16.mxu0 0
        %1296 = vmatpush1.bf16.msra.mxu0 0
        %1297 = vmatprep.subr.bf16.mxu0 0
        %1298 = vmatpush1.bf16.msra.mxu0 0
        %1299 = vmatprep.subr.bf16.mxu0 0
        %1300 = vmatpush1.bf16.msra.mxu0 0
        %1301 = vmatprep.mubr.bf16.mxu0 0
        %1302 = vmatmul.mubr.bf16.gmra.mrb[0].mxu0 %v1243
        %v1303 = vpop.f32.mrb[0].mxu0
        %v1304 = vadd.f32 0.0, %v1303
        %v1305 = vpop.f32.mrb[0].mxu0
        %v1306 = vpop.f32.mrb[0].mxu0
        %v1307 = vadd.f32 0.0, %v1306
        %v1308 = vpop.f32.mrb[0].mxu0
        %1309 = vmatprep.mubr.bf16.mxu0 0
        %1310 = vmatmul.mubr.bf16.gmra.mrb[0].mxu0 %v1246
        %v1311 = vpop.f32.mrb[0].mxu0
        %v1312 = vadd.f32 0.0, %v1311
        %v1313 = vpop.f32.mrb[0].mxu0
        %v1314 = vpop.f32.mrb[0].mxu0
        %v1315 = vadd.f32 0.0, %v1314
        %v1316 = vpop.f32.mrb[0].mxu0
        %1317 = vmatprep.mubr.bf16.mxu0 0
        %1318 = vmatmul.mubr.bf16.gmra.mrb[0].mxu0 %v1249
        %v1319 = vpop.f32.mrb[0].mxu0
        %v1320 = vadd.f32 0.0, %v1319
        %v1321 = vpop.f32.mrb[0].mxu0
        %v1322 = vpop.f32.mrb[0].mxu0
        %v1323 = vadd.f32 0.0, %v1322
        %v1324 = vpop.f32.mrb[0].mxu0
        %1325 = vmatprep.mubr.bf16.mxu0 0
        %1326 = vmatmul.mubr.bf16.gmra.mrb[0].mxu0 %v1252
        %v1327 = vpop.f32.mrb[0].mxu0
        %v1328 = vadd.f32 0.0, %v1327
        %v1329 = vpop.f32.mrb[0].mxu0
        %v1330 = vpop.f32.mrb[0].mxu0
        %v1331 = vadd.f32 0.0, %v1330
        %v1332 = vpop.f32.mrb[0].mxu0
        %1333 = vmatprep.mubr.bf16.mxu0 0
        %1334 = vmatmul.mubr.bf16.gmra.mrb[0].mxu0 %v1255
        %v1335 = vpop.f32.mrb[0].mxu0
        %v1336 = vadd.f32 0.0, %v1335
        %v1337 = vpop.f32.mrb[0].mxu0
        %v1338 = vpop.f32.mrb[0].mxu0
        %v1339 = vadd.f32 0.0, %v1338
        %v1340 = vpop.f32.mrb[0].mxu0
        %1341 = vmatprep.mubr.bf16.mxu0 0
        %1342 = vmatmul.mubr.bf16.gmra.mrb[0].mxu0 %v1258
        %v1343 = vpop.f32.mrb[0].mxu0
        %v1344 = vadd.f32 0.0, %v1343
        %v1345 = vpop.f32.mrb[0].mxu0
        %v1346 = vpop.f32.mrb[0].mxu0
        %v1347 = vadd.f32 0.0, %v1346
        %v1348 = vpop.f32.mrb[0].mxu0
        %1349 = vmatprep.mubr.bf16.mxu0 0
        %1350 = vmatmul.mubr.bf16.gmra.mrb[0].mxu0 %v1261
        %v1351 = vpop.f32.mrb[0].mxu0
        %v1352 = vadd.f32 0.0, %v1351
        %v1353 = vpop.f32.mrb[0].mxu0
        %v1354 = vpop.f32.mrb[0].mxu0
        %v1355 = vadd.f32 0.0, %v1354
        %v1356 = vpop.f32.mrb[0].mxu0
        %1357 = vmatprep.mubr.bf16.mxu0 0
        %1358 = vmatmul.mubr.bf16.gmra.mrb[0].mxu0 %v1264
        %v1359 = vpop.f32.mrb[0].mxu0
        %v1360 = vadd.f32 0.0, %v1359
        %v1361 = vpop.f32.mrb[0].mxu0
        %v1362 = vpop.f32.mrb[0].mxu0
        %v1363 = vadd.f32 0.0, %v1362
        %v1364 = vpop.f32.mrb[0].mxu0
        %1365 = vmatprep.mubr.bf16.mxu0 0
        %1366 = vmatmul.mubr.bf16.gmra.mrb[0].mxu0 %v1267
        %v1367 = vpop.f32.mrb[0].mxu0
        %v1368 = vadd.f32 0.0, %v1367
        %v1369 = vpop.f32.mrb[0].mxu0
        %v1370 = vpop.f32.mrb[0].mxu0
        %v1371 = vadd.f32 0.0, %v1370
        %v1372 = vpop.f32.mrb[0].mxu0
        %1373 = vdwg.mxu0
        %v1374 = vadd.f32 %v1113, %v1304
        %v1375 = vadd.f32 %v1114, %v1307
        %v1376 = vadd.f32 %v1115, %v1312
        %v1377 = vadd.f32 %v1116, %v1315
        %v1378 = vadd.f32 %v1117, %v1320
        %v1379 = vadd.f32 %v1118, %v1323
        %v1380 = vadd.f32 %v1119, %v1328
        %v1381 = vadd.f32 %v1120, %v1331
        %v1382 = vadd.f32 %v1121, %v1336
        %v1383 = vadd.f32 %v1122, %v1339
        %v1384 = vadd.f32 %v1123, %v1344
        %v1385 = vadd.f32 %v1124, %v1347
        %v1386 = vadd.f32 %v1125, %v1352
        %v1387 = vadd.f32 %v1126, %v1355
        %v1388 = vadd.f32 %v1127, %v1360
        %v1389 = vadd.f32 %v1128, %v1363
        %v1390 = vadd.f32 %v1129, %v1368
        %v1391 = vadd.f32 %v1130, %v1371
        %v1392 = vld [vmem:[%s252 + $0x8] sm:$0xc]
        %s1393 = scalar_lea.vmem %s1, 80
        %v1394 = vld [vmem:[%s1393] sm:$0xf]
        %v1395 = vld [vmem:[%s1393 + $0x4] sm:$0xf]
        %v1396 = vld [vmem:[%s1393 + $0x8] sm:$0xf]
        %v1397 = vld [vmem:[%s1393 + $0xc] sm:$0xf]
        %v1399 = vunpack.c.l.b16 %v1392
        %v1400 = vpack.c.b16 %v922, %v1399
        %vm1401 = vcmask 1045504
        %v1402 = vrot.slane %v1400, 2
        %v1403 = vrot.slane %v941, 2
        %v1404 = vsel %vm1401, %v1402, %v1403
        %v1405 = vrot.slane %v942, 2
        %v1406 = vsel %vm1401, %v1403, %v1405
        %v1407 = vrot.slane %v943, 2
        %v1408 = vsel %vm1401, %v1405, %v1407
        %v1409 = vrot.slane %v944, 2
        %v1410 = vsel %vm1401, %v1407, %v1409
        %v1411 = vrot.slane %v945, 2
        %v1412 = vsel %vm1401, %v1409, %v1411
        %v1413 = vrot.slane %v946, 2
        %v1414 = vsel %vm1401, %v1411, %v1413
        %v1415 = vrot.slane %v947, 2
        %v1416 = vsel %vm1401, %v1413, %v1415
        %v1417 = vrot.slane %v948, 2
        %v1418 = vsel %vm1401, %v1415, %v1417
        %v1419 = vrot.slane %v1139, 2
        %v1420 = vsel %vm1401, %v1417, %v1419
        %v1425 = vunpack.c.l.b16 %v1394
        %v1426 = vunpack.c.l.b16 %v1395
        %v1427 = vunpack.c.l.b16 %v1396
        %v1428 = vunpack.c.l.b16 %v1397
        %v1429 = vpack.c.b16 %v1426, %v1425
        %v1430 = vpack.c.b16 %v1428, %v1427
        %v1434 = vsel %vm419, %v1404, 0
        %v1437 = vsel %vm419, %v1406, 0
        %v1440 = vsel %vm419, %v1408, 0
        %v1443 = vsel %vm419, %v1410, 0
        %v1446 = vsel %vm419, %v1412, 0
        %v1449 = vsel %vm419, %v1414, 0
        %v1452 = vsel %vm419, %v1416, 0
        %v1455 = vsel %vm419, %v1418, 0
        %v1458 = vsel %vm419, %v1420, 0
        %1460 = vmatprep.subr.bf16.mxu0 0
        %1461 = vmatpush1.bf16.msra.mxu0 %v1429
        %1462 = vmatprep.subr.bf16.mxu0 0
        %1463 = vmatpush1.bf16.msra.mxu0 %v1430
        %1464 = vmatprep.subr.bf16.mxu0 0
        %1465 = vmatpush1.bf16.msra.mxu0 0
        %1466 = vmatprep.subr.bf16.mxu0 0
        %1467 = vmatpush1.bf16.msra.mxu0 0
        %1468 = vmatprep.subr.bf16.mxu0 0
        %1469 = vmatpush1.bf16.msra.mxu0 0
        %1470 = vmatprep.subr.bf16.mxu0 0
        %1471 = vmatpush1.bf16.msra.mxu0 0
        %1472 = vmatprep.subr.bf16.mxu0 0
        %1473 = vmatpush1.bf16.msra.mxu0 0
        %1474 = vmatprep.subr.bf16.mxu0 0
        %1475 = vmatpush1.bf16.msra.mxu0 0
        %1476 = vmatprep.subr.bf16.mxu0 0
        %1477 = vmatpush1.bf16.msra.mxu0 0
        %1478 = vmatprep.subr.bf16.mxu0 0
        %1479 = vmatpush1.bf16.msra.mxu0 0
        %1480 = vmatprep.subr.bf16.mxu0 0
        %1481 = vmatpush1.bf16.msra.mxu0 0
        %1482 = vmatprep.subr.bf16.mxu0 0
        %1483 = vmatpush1.bf16.msra.mxu0 0
        %1484 = vmatprep.subr.bf16.mxu0 0
        %1485 = vmatpush1.bf16.msra.mxu0 0
        %1486 = vmatprep.subr.bf16.mxu0 0
        %1487 = vmatpush1.bf16.msra.mxu0 0
        %1488 = vmatprep.subr.bf16.mxu0 0
        %1489 = vmatpush1.bf16.msra.mxu0 0
        %1490 = vmatprep.subr.bf16.mxu0 0
        %1491 = vmatpush1.bf16.msra.mxu0 0
        %1492 = vmatprep.mubr.bf16.mxu0 0
        %1493 = vmatmul.mubr.bf16.gmra.mrb[0].mxu0 %v1434
        %v1494 = vpop.f32.mrb[0].mxu0
        %v1495 = vadd.f32 0.0, %v1494
        %v1496 = vpop.f32.mrb[0].mxu0
        %v1497 = vpop.f32.mrb[0].mxu0
        %v1498 = vadd.f32 0.0, %v1497
        %v1499 = vpop.f32.mrb[0].mxu0
        %1500 = vmatprep.mubr.bf16.mxu0 0
        %1501 = vmatmul.mubr.bf16.gmra.mrb[0].mxu0 %v1437
        %v1502 = vpop.f32.mrb[0].mxu0
        %v1503 = vadd.f32 0.0, %v1502
        %v1504 = vpop.f32.mrb[0].mxu0
        %v1505 = vpop.f32.mrb[0].mxu0
        %v1506 = vadd.f32 0.0, %v1505
        %v1507 = vpop.f32.mrb[0].mxu0
        %1508 = vmatprep.mubr.bf16.mxu0 0
        %1509 = vmatmul.mubr.bf16.gmra.mrb[0].mxu0 %v1440
        %v1510 = vpop.f32.mrb[0].mxu0
        %v1511 = vadd.f32 0.0, %v1510
        %v1512 = vpop.f32.mrb[0].mxu0
        %v1513 = vpop.f32.mrb[0].mxu0
        %v1514 = vadd.f32 0.0, %v1513
        %v1515 = vpop.f32.mrb[0].mxu0
        %1516 = vmatprep.mubr.bf16.mxu0 0
        %1517 = vmatmul.mubr.bf16.gmra.mrb[0].mxu0 %v1443
        %v1518 = vpop.f32.mrb[0].mxu0
        %v1519 = vadd.f32 0.0, %v1518
        %v1520 = vpop.f32.mrb[0].mxu0
        %v1521 = vpop.f32.mrb[0].mxu0
        %v1522 = vadd.f32 0.0, %v1521
        %v1523 = vpop.f32.mrb[0].mxu0
        %1524 = vmatprep.mubr.bf16.mxu0 0
        %1525 = vmatmul.mubr.bf16.gmra.mrb[0].mxu0 %v1446
        %v1526 = vpop.f32.mrb[0].mxu0
        %v1527 = vadd.f32 0.0, %v1526
        %v1528 = vpop.f32.mrb[0].mxu0
        %v1529 = vpop.f32.mrb[0].mxu0
        %v1530 = vadd.f32 0.0, %v1529
        %v1531 = vpop.f32.mrb[0].mxu0
        %1532 = vmatprep.mubr.bf16.mxu0 0
        %1533 = vmatmul.mubr.bf16.gmra.mrb[0].mxu0 %v1449
        %v1534 = vpop.f32.mrb[0].mxu0
        %v1535 = vadd.f32 0.0, %v1534
        %v1536 = vpop.f32.mrb[0].mxu0
        %v1537 = vpop.f32.mrb[0].mxu0
        %v1538 = vadd.f32 0.0, %v1537
        %v1539 = vpop.f32.mrb[0].mxu0
        %1540 = vmatprep.mubr.bf16.mxu0 0
        %1541 = vmatmul.mubr.bf16.gmra.mrb[0].mxu0 %v1452
        %v1542 = vpop.f32.mrb[0].mxu0
        %v1543 = vadd.f32 0.0, %v1542
        %v1544 = vpop.f32.mrb[0].mxu0
        %v1545 = vpop.f32.mrb[0].mxu0
        %v1546 = vadd.f32 0.0, %v1545
        %v1547 = vpop.f32.mrb[0].mxu0
        %1548 = vmatprep.mubr.bf16.mxu0 0
        %1549 = vmatmul.mubr.bf16.gmra.mrb[0].mxu0 %v1455
        %v1550 = vpop.f32.mrb[0].mxu0
        %v1551 = vadd.f32 0.0, %v1550
        %v1552 = vpop.f32.mrb[0].mxu0
        %v1553 = vpop.f32.mrb[0].mxu0
        %v1554 = vadd.f32 0.0, %v1553
        %v1555 = vpop.f32.mrb[0].mxu0
        %1556 = vmatprep.mubr.bf16.mxu0 0
        %1557 = vmatmul.mubr.bf16.gmra.mrb[0].mxu0 %v1458
        %v1558 = vpop.f32.mrb[0].mxu0
        %v1559 = vadd.f32 0.0, %v1558
        %v1560 = vpop.f32.mrb[0].mxu0
        %v1561 = vpop.f32.mrb[0].mxu0
        %v1562 = vadd.f32 0.0, %v1561
        %v1563 = vpop.f32.mrb[0].mxu0
        %1564 = vdwg.mxu0
        %v1565 = vadd.f32 %v1374, %v1495
        %v1566 = vadd.f32 %v1375, %v1498
        %v1567 = vadd.f32 %v1376, %v1503
        %v1568 = vadd.f32 %v1377, %v1506
        %v1569 = vadd.f32 %v1378, %v1511
        %v1570 = vadd.f32 %v1379, %v1514
        %v1571 = vadd.f32 %v1380, %v1519
        %v1572 = vadd.f32 %v1381, %v1522
        %v1573 = vadd.f32 %v1382, %v1527
        %v1574 = vadd.f32 %v1383, %v1530
        %v1575 = vadd.f32 %v1384, %v1535
        %v1576 = vadd.f32 %v1385, %v1538
        %v1577 = vadd.f32 %v1386, %v1543
        %v1578 = vadd.f32 %v1387, %v1546
        %v1579 = vadd.f32 %v1388, %v1551
        %v1580 = vadd.f32 %v1389, %v1554
        %v1581 = vadd.f32 %v1390, %v1559
        %v1582 = vadd.f32 %v1391, %v1562
        %v1583 = vld [vmem:[%s252 + $0x10] sm:$0xc]
        %v1584 = vld [vmem:[%s252 + $0x14] sm:$0xf]
        %v1585 = vld [vmem:[%s252 + $0x18] sm:$0xf]
        %v1586 = vld [vmem:[%s252 + $0x1c] sm:$0xf]
        %v1587 = vld [vmem:[%s252 + $0x20] sm:$0xf]
        %v1588 = vld [vmem:[%s252 + $0x24] sm:$0xf]
        %v1589 = vld [vmem:[%s252 + $0x28] sm:$0xf]
        %v1590 = vld [vmem:[%s252 + $0x2c] sm:$0xf]
        %v1591 = vld [vmem:[%s252 + $0x30] sm:$0xf]
        %v1592 = vld [vmem:[%s252 + $0x34] sm:$0xf]
        %v1593 = vld [vmem:[%s252 + $0x38] sm:$0xf]
        %v1594 = vld [vmem:[%s252 + $0x3c] sm:$0xf]
        %v1595 = vld [vmem:[%s252 + $0x40] sm:$0xf]
        %v1596 = vld [vmem:[%s252 + $0x44] sm:$0xf]
        %v1597 = vld [vmem:[%s252 + $0x48] sm:$0xf]
        %v1598 = vld [vmem:[%s252 + $0x4c] sm:$0xf]
        %v1599 = vld [vmem:[%s252 + $0x50] sm:$0xf]
        %v1600 = vld [vmem:[%s252 + $0x54] sm:$0xf]
        %v1601 = vld [vmem:[%s252 + $0x58] sm:$0x3]
        %s1602 = scalar_lea.vmem %s1, 96
        %v1603 = vld [vmem:[%s1602] sm:$0xf]
        %v1604 = vld [vmem:[%s1602 + $0x4] sm:$0xf]
        %v1605 = vld [vmem:[%s1602 + $0x8] sm:$0xf]
        %v1606 = vld [vmem:[%s1602 + $0xc] sm:$0xf]
        %v1626 = vunpack.c.l.b16 %v1583
        %v1627 = vunpack.c.l.b16 %v1584
        %v1628 = vunpack.c.l.b16 %v1585
        %v1629 = vunpack.c.l.b16 %v1586
        %v1630 = vunpack.c.l.b16 %v1587
        %v1631 = vunpack.c.l.b16 %v1588
        %v1632 = vunpack.c.l.b16 %v1589
        %v1633 = vunpack.c.l.b16 %v1590
        %v1634 = vunpack.c.l.b16 %v1591
        %v1635 = vunpack.c.l.b16 %v1592
        %v1636 = vunpack.c.l.b16 %v1593
        %v1637 = vunpack.c.l.b16 %v1594
        %v1638 = vunpack.c.l.b16 %v1595
        %v1639 = vunpack.c.l.b16 %v1596
        %v1640 = vunpack.c.l.b16 %v1597
        %v1641 = vunpack.c.l.b16 %v1598
        %v1642 = vunpack.c.l.b16 %v1599
        %v1643 = vunpack.c.l.b16 %v1600
        %v1644 = vunpack.c.l.b16 %v1601
        %v1645 = vpack.c.b16 %v1627, %v1626
        %v1646 = vpack.c.b16 %v1629, %v1628
        %v1647 = vpack.c.b16 %v1631, %v1630
        %v1648 = vpack.c.b16 %v1633, %v1632
        %v1649 = vpack.c.b16 %v1635, %v1634
        %v1650 = vpack.c.b16 %v1637, %v1636
        %v1651 = vpack.c.b16 %v1639, %v1638
        %v1652 = vpack.c.b16 %v1641, %v1640
        %v1653 = vpack.c.b16 %v1643, %v1642
        %v1654 = vpack.c.b16 %v1644, %v1644
        %v1655 = vrot.slane %v1645, 2
        %v1656 = vrot.slane %v1646, 2
        %v1657 = vsel %vm1401, %v1655, %v1656
        %v1658 = vrot.slane %v1647, 2
        %v1659 = vsel %vm1401, %v1656, %v1658
        %v1660 = vrot.slane %v1648, 2
        %v1661 = vsel %vm1401, %v1658, %v1660
        %v1662 = vrot.slane %v1649, 2
        %v1663 = vsel %vm1401, %v1660, %v1662
        %v1664 = vrot.slane %v1650, 2
        %v1665 = vsel %vm1401, %v1662, %v1664
        %v1666 = vrot.slane %v1651, 2
        %v1667 = vsel %vm1401, %v1664, %v1666
        %v1668 = vrot.slane %v1652, 2
        %v1669 = vsel %vm1401, %v1666, %v1668
        %v1670 = vrot.slane %v1653, 2
        %v1671 = vsel %vm1401, %v1668, %v1670
        %v1672 = vrot.slane %v1654, 2
        %v1673 = vsel %vm1401, %v1670, %v1672
        %v1678 = vunpack.c.l.b16 %v1603
        %v1679 = vunpack.c.l.b16 %v1604
        %v1680 = vunpack.c.l.b16 %v1605
        %v1681 = vunpack.c.l.b16 %v1606
        %v1682 = vpack.c.b16 %v1679, %v1678
        %v1683 = vpack.c.b16 %v1681, %v1680
        %v1687 = vsel %vm419, %v1657, 0
        %v1690 = vsel %vm419, %v1659, 0
        %v1693 = vsel %vm419, %v1661, 0
        %v1696 = vsel %vm419, %v1663, 0
        %v1699 = vsel %vm419, %v1665, 0
        %v1702 = vsel %vm419, %v1667, 0
        %v1705 = vsel %vm419, %v1669, 0
        %v1708 = vsel %vm419, %v1671, 0
        %v1711 = vsel %vm419, %v1673, 0
        %1713 = vmatprep.subr.bf16.mxu0 0
        %1714 = vmatpush1.bf16.msra.mxu0 %v1682
        %1715 = vmatprep.subr.bf16.mxu0 0
        %1716 = vmatpush1.bf16.msra.mxu0 %v1683
        %1717 = vmatprep.subr.bf16.mxu0 0
        %1718 = vmatpush1.bf16.msra.mxu0 0
        %1719 = vmatprep.subr.bf16.mxu0 0
        %1720 = vmatpush1.bf16.msra.mxu0 0
        %1721 = vmatprep.subr.bf16.mxu0 0
        %1722 = vmatpush1.bf16.msra.mxu0 0
        %1723 = vmatprep.subr.bf16.mxu0 0
        %1724 = vmatpush1.bf16.msra.mxu0 0
        %1725 = vmatprep.subr.bf16.mxu0 0
        %1726 = vmatpush1.bf16.msra.mxu0 0
        %1727 = vmatprep.subr.bf16.mxu0 0
        %1728 = vmatpush1.bf16.msra.mxu0 0
        %1729 = vmatprep.subr.bf16.mxu0 0
        %1730 = vmatpush1.bf16.msra.mxu0 0
        %1731 = vmatprep.subr.bf16.mxu0 0
        %1732 = vmatpush1.bf16.msra.mxu0 0
        %1733 = vmatprep.subr.bf16.mxu0 0
        %1734 = vmatpush1.bf16.msra.mxu0 0
        %1735 = vmatprep.subr.bf16.mxu0 0
        %1736 = vmatpush1.bf16.msra.mxu0 0
        %1737 = vmatprep.subr.bf16.mxu0 0
        %1738 = vmatpush1.bf16.msra.mxu0 0
        %1739 = vmatprep.subr.bf16.mxu0 0
        %1740 = vmatpush1.bf16.msra.mxu0 0
        %1741 = vmatprep.subr.bf16.mxu0 0
        %1742 = vmatpush1.bf16.msra.mxu0 0
        %1743 = vmatprep.subr.bf16.mxu0 0
        %1744 = vmatpush1.bf16.msra.mxu0 0
        %1745 = vmatprep.mubr.bf16.mxu0 0
        %1746 = vmatmul.mubr.bf16.gmra.mrb[0].mxu0 %v1687
        %v1747 = vpop.f32.mrb[0].mxu0
        %v1748 = vadd.f32 0.0, %v1747
        %v1749 = vpop.f32.mrb[0].mxu0
        %v1750 = vpop.f32.mrb[0].mxu0
        %v1751 = vadd.f32 0.0, %v1750
        %v1752 = vpop.f32.mrb[0].mxu0
        %1753 = vmatprep.mubr.bf16.mxu0 0
        %1754 = vmatmul.mubr.bf16.gmra.mrb[0].mxu0 %v1690
        %v1755 = vpop.f32.mrb[0].mxu0
        %v1756 = vadd.f32 0.0, %v1755
        %v1757 = vpop.f32.mrb[0].mxu0
        %v1758 = vpop.f32.mrb[0].mxu0
        %v1759 = vadd.f32 0.0, %v1758
        %v1760 = vpop.f32.mrb[0].mxu0
        %1761 = vmatprep.mubr.bf16.mxu0 0
        %1762 = vmatmul.mubr.bf16.gmra.mrb[0].mxu0 %v1693
        %v1763 = vpop.f32.mrb[0].mxu0
        %v1764 = vadd.f32 0.0, %v1763
        %v1765 = vpop.f32.mrb[0].mxu0
        %v1766 = vpop.f32.mrb[0].mxu0
        %v1767 = vadd.f32 0.0, %v1766
        %v1768 = vpop.f32.mrb[0].mxu0
        %1769 = vmatprep.mubr.bf16.mxu0 0
        %1770 = vmatmul.mubr.bf16.gmra.mrb[0].mxu0 %v1696
        %v1771 = vpop.f32.mrb[0].mxu0
        %v1772 = vadd.f32 0.0, %v1771
        %v1773 = vpop.f32.mrb[0].mxu0
        %v1774 = vpop.f32.mrb[0].mxu0
        %v1775 = vadd.f32 0.0, %v1774
        %v1776 = vpop.f32.mrb[0].mxu0
        %1777 = vmatprep.mubr.bf16.mxu0 0
        %1778 = vmatmul.mubr.bf16.gmra.mrb[0].mxu0 %v1699
        %v1779 = vpop.f32.mrb[0].mxu0
        %v1780 = vadd.f32 0.0, %v1779
        %v1781 = vpop.f32.mrb[0].mxu0
        %v1782 = vpop.f32.mrb[0].mxu0
        %v1783 = vadd.f32 0.0, %v1782
        %v1784 = vpop.f32.mrb[0].mxu0
        %1785 = vmatprep.mubr.bf16.mxu0 0
        %1786 = vmatmul.mubr.bf16.gmra.mrb[0].mxu0 %v1702
        %v1787 = vpop.f32.mrb[0].mxu0
        %v1788 = vadd.f32 0.0, %v1787
        %v1789 = vpop.f32.mrb[0].mxu0
        %v1790 = vpop.f32.mrb[0].mxu0
        %v1791 = vadd.f32 0.0, %v1790
        %v1792 = vpop.f32.mrb[0].mxu0
        %1793 = vmatprep.mubr.bf16.mxu0 0
        %1794 = vmatmul.mubr.bf16.gmra.mrb[0].mxu0 %v1705
        %v1795 = vpop.f32.mrb[0].mxu0
        %v1796 = vadd.f32 0.0, %v1795
        %v1797 = vpop.f32.mrb[0].mxu0
        %v1798 = vpop.f32.mrb[0].mxu0
        %v1799 = vadd.f32 0.0, %v1798
        %v1800 = vpop.f32.mrb[0].mxu0
        %1801 = vmatprep.mubr.bf16.mxu0 0
        %1802 = vmatmul.mubr.bf16.gmra.mrb[0].mxu0 %v1708
        %v1803 = vpop.f32.mrb[0].mxu0
        %v1804 = vadd.f32 0.0, %v1803
        %v1805 = vpop.f32.mrb[0].mxu0
        %v1806 = vpop.f32.mrb[0].mxu0
        %v1807 = vadd.f32 0.0, %v1806
        %v1808 = vpop.f32.mrb[0].mxu0
        %1809 = vmatprep.mubr.bf16.mxu0 0
        %1810 = vmatmul.mubr.bf16.gmra.mrb[0].mxu0 %v1711
        %v1811 = vpop.f32.mrb[0].mxu0
        %v1812 = vadd.f32 0.0, %v1811
        %v1813 = vpop.f32.mrb[0].mxu0
        %v1814 = vpop.f32.mrb[0].mxu0
        %v1815 = vadd.f32 0.0, %v1814
        %v1816 = vpop.f32.mrb[0].mxu0
        %1817 = vdwg.mxu0
        %v1818 = vadd.f32 %v1565, %v1748
        %v1819 = vadd.f32 %v1566, %v1751
        %v1820 = vadd.f32 %v1567, %v1756
        %v1821 = vadd.f32 %v1568, %v1759
        %v1822 = vadd.f32 %v1569, %v1764
        %v1823 = vadd.f32 %v1570, %v1767
        %v1824 = vadd.f32 %v1571, %v1772
        %v1825 = vadd.f32 %v1572, %v1775
        %v1826 = vadd.f32 %v1573, %v1780
        %v1827 = vadd.f32 %v1574, %v1783
        %v1828 = vadd.f32 %v1575, %v1788
        %v1829 = vadd.f32 %v1576, %v1791
        %v1830 = vadd.f32 %v1577, %v1796
        %v1831 = vadd.f32 %v1578, %v1799
        %v1832 = vadd.f32 %v1579, %v1804
        %v1833 = vadd.f32 %v1580, %v1807
        %v1834 = vadd.f32 %v1581, %v1812
        %v1835 = vadd.f32 %v1582, %v1815
        %v1836 = vld [vmem:[%s252 + $0x58] sm:$0x7]
        %s1837 = scalar_lea.vmem %s1, 112
        %v1838 = vld [vmem:[%s1837] sm:$0xf]
        %v1839 = vld [vmem:[%s1837 + $0x4] sm:$0xf]
        %v1840 = vld [vmem:[%s1837 + $0x8] sm:$0xf]
        %v1841 = vld [vmem:[%s1837 + $0xc] sm:$0xf]
        %v1843 = vunpack.c.l.b16 %v1836
        %v1844 = vpack.c.b16 %v1843, %v1843
        %vm1845 = vsmask.f32 5376
        %v1847 = vshrl.u32 %v1645, 16
        %v1849 = vrot.slane %v1847, 2
        %v1850 = vshll.u32 %v1645, 16
        %v1852 = vrot.slane %v1850, 3
        %v1853 = vor.u32 %v1849, %v1852
        %v1855 = vshrl.u32 %v1646, 16
        %v1857 = vrot.slane %v1855, 2
        %v1858 = vshll.u32 %v1646, 16
        %v1860 = vrot.slane %v1858, 3
        %v1861 = vor.u32 %v1857, %v1860
        %v1862 = vsel %vm1845, %v1853, %v1861
        %v1864 = vshrl.u32 %v1647, 16
        %v1866 = vrot.slane %v1864, 2
        %v1867 = vshll.u32 %v1647, 16
        %v1869 = vrot.slane %v1867, 3
        %v1870 = vor.u32 %v1866, %v1869
        %v1871 = vsel %vm1845, %v1861, %v1870
        %v1873 = vshrl.u32 %v1648, 16
        %v1875 = vrot.slane %v1873, 2
        %v1876 = vshll.u32 %v1648, 16
        %v1878 = vrot.slane %v1876, 3
        %v1879 = vor.u32 %v1875, %v1878
        %v1880 = vsel %vm1845, %v1870, %v1879
        %v1882 = vshrl.u32 %v1649, 16
        %v1884 = vrot.slane %v1882, 2
        %v1885 = vshll.u32 %v1649, 16
        %v1887 = vrot.slane %v1885, 3
        %v1888 = vor.u32 %v1884, %v1887
        %v1889 = vsel %vm1845, %v1879, %v1888
        %v1891 = vshrl.u32 %v1650, 16
        %v1893 = vrot.slane %v1891, 2
        %v1894 = vshll.u32 %v1650, 16
        %v1896 = vrot.slane %v1894, 3
        %v1897 = vor.u32 %v1893, %v1896
        %v1898 = vsel %vm1845, %v1888, %v1897
        %v1900 = vshrl.u32 %v1651, 16
        %v1902 = vrot.slane %v1900, 2
        %v1903 = vshll.u32 %v1651, 16
        %v1905 = vrot.slane %v1903, 3
        %v1906 = vor.u32 %v1902, %v1905
        %v1907 = vsel %vm1845, %v1897, %v1906
        %v1909 = vshrl.u32 %v1652, 16
        %v1911 = vrot.slane %v1909, 2
        %v1912 = vshll.u32 %v1652, 16
        %v1914 = vrot.slane %v1912, 3
        %v1915 = vor.u32 %v1911, %v1914
        %v1916 = vsel %vm1845, %v1906, %v1915
        %v1918 = vshrl.u32 %v1653, 16
        %v1920 = vrot.slane %v1918, 2
        %v1921 = vshll.u32 %v1653, 16
        %v1923 = vrot.slane %v1921, 3
        %v1924 = vor.u32 %v1920, %v1923
        %v1925 = vsel %vm1845, %v1915, %v1924
        %v1927 = vshrl.u32 %v1844, 16
        %v1929 = vrot.slane %v1927, 2
        %v1930 = vshll.u32 %v1844, 16
        %v1932 = vrot.slane %v1930, 3
        %v1933 = vor.u32 %v1929, %v1932
        %v1934 = vsel %vm1845, %v1924, %v1933
        %v1939 = vunpack.c.l.b16 %v1838
        %v1940 = vunpack.c.l.b16 %v1839
        %v1941 = vunpack.c.l.b16 %v1840
        %v1942 = vunpack.c.l.b16 %v1841
        %v1943 = vpack.c.b16 %v1940, %v1939
        %v1944 = vpack.c.b16 %v1942, %v1941
        %v1948 = vsel %vm419, %v1862, 0
        %v1951 = vsel %vm419, %v1871, 0
        %v1954 = vsel %vm419, %v1880, 0
        %v1957 = vsel %vm419, %v1889, 0
        %v1960 = vsel %vm419, %v1898, 0
        %v1963 = vsel %vm419, %v1907, 0
        %v1966 = vsel %vm419, %v1916, 0
        %v1969 = vsel %vm419, %v1925, 0
        %v1972 = vsel %vm419, %v1934, 0
        %1974 = vmatprep.subr.bf16.mxu0 0
        %1975 = vmatpush1.bf16.msra.mxu0 %v1943
        %1976 = vmatprep.subr.bf16.mxu0 0
        %1977 = vmatpush1.bf16.msra.mxu0 %v1944
        %1978 = vmatprep.subr.bf16.mxu0 0
        %1979 = vmatpush1.bf16.msra.mxu0 0
        %1980 = vmatprep.subr.bf16.mxu0 0
        %1981 = vmatpush1.bf16.msra.mxu0 0
        %1982 = vmatprep.subr.bf16.mxu0 0
        %1983 = vmatpush1.bf16.msra.mxu0 0
        %1984 = vmatprep.subr.bf16.mxu0 0
        %1985 = vmatpush1.bf16.msra.mxu0 0
        %1986 = vmatprep.subr.bf16.mxu0 0
        %1987 = vmatpush1.bf16.msra.mxu0 0
        %1988 = vmatprep.subr.bf16.mxu0 0
        %1989 = vmatpush1.bf16.msra.mxu0 0
        %1990 = vmatprep.subr.bf16.mxu0 0
        %1991 = vmatpush1.bf16.msra.mxu0 0
        %1992 = vmatprep.subr.bf16.mxu0 0
        %1993 = vmatpush1.bf16.msra.mxu0 0
        %1994 = vmatprep.subr.bf16.mxu0 0
        %1995 = vmatpush1.bf16.msra.mxu0 0
        %1996 = vmatprep.subr.bf16.mxu0 0
        %1997 = vmatpush1.bf16.msra.mxu0 0
        %1998 = vmatprep.subr.bf16.mxu0 0
        %1999 = vmatpush1.bf16.msra.mxu0 0
        %2000 = vmatprep.subr.bf16.mxu0 0
        %2001 = vmatpush1.bf16.msra.mxu0 0
        %2002 = vmatprep.subr.bf16.mxu0 0
        %2003 = vmatpush1.bf16.msra.mxu0 0
        %2004 = vmatprep.subr.bf16.mxu0 0
        %2005 = vmatpush1.bf16.msra.mxu0 0
        %2006 = vmatprep.mubr.bf16.mxu0 0
        %2007 = vmatmul.mubr.bf16.gmra.mrb[0].mxu0 %v1948
        %v2008 = vpop.f32.mrb[0].mxu0
        %v2009 = vadd.f32 0.0, %v2008
        %v2010 = vpop.f32.mrb[0].mxu0
        %v2011 = vpop.f32.mrb[0].mxu0
        %v2012 = vadd.f32 0.0, %v2011
        %v2013 = vpop.f32.mrb[0].mxu0
        %2014 = vmatprep.mubr.bf16.mxu0 0
        %2015 = vmatmul.mubr.bf16.gmra.mrb[0].mxu0 %v1951
        %v2016 = vpop.f32.mrb[0].mxu0
        %v2017 = vadd.f32 0.0, %v2016
        %v2018 = vpop.f32.mrb[0].mxu0
        %v2019 = vpop.f32.mrb[0].mxu0
        %v2020 = vadd.f32 0.0, %v2019
        %v2021 = vpop.f32.mrb[0].mxu0
        %2022 = vmatprep.mubr.bf16.mxu0 0
        %2023 = vmatmul.mubr.bf16.gmra.mrb[0].mxu0 %v1954
        %v2024 = vpop.f32.mrb[0].mxu0
        %v2025 = vadd.f32 0.0, %v2024
        %v2026 = vpop.f32.mrb[0].mxu0
        %v2027 = vpop.f32.mrb[0].mxu0
        %v2028 = vadd.f32 0.0, %v2027
        %v2029 = vpop.f32.mrb[0].mxu0
        %2030 = vmatprep.mubr.bf16.mxu0 0
        %2031 = vmatmul.mubr.bf16.gmra.mrb[0].mxu0 %v1957
        %v2032 = vpop.f32.mrb[0].mxu0
        %v2033 = vadd.f32 0.0, %v2032
        %v2034 = vpop.f32.mrb[0].mxu0
        %v2035 = vpop.f32.mrb[0].mxu0
        %v2036 = vadd.f32 0.0, %v2035
        %v2037 = vpop.f32.mrb[0].mxu0
        %2038 = vmatprep.mubr.bf16.mxu0 0
        %2039 = vmatmul.mubr.bf16.gmra.mrb[0].mxu0 %v1960
        %v2040 = vpop.f32.mrb[0].mxu0
        %v2041 = vadd.f32 0.0, %v2040
        %v2042 = vpop.f32.mrb[0].mxu0
        %v2043 = vpop.f32.mrb[0].mxu0
        %v2044 = vadd.f32 0.0, %v2043
        %v2045 = vpop.f32.mrb[0].mxu0
        %2046 = vmatprep.mubr.bf16.mxu0 0
        %2047 = vmatmul.mubr.bf16.gmra.mrb[0].mxu0 %v1963
        %v2048 = vpop.f32.mrb[0].mxu0
        %v2049 = vadd.f32 0.0, %v2048
        %v2050 = vpop.f32.mrb[0].mxu0
        %v2051 = vpop.f32.mrb[0].mxu0
        %v2052 = vadd.f32 0.0, %v2051
        %v2053 = vpop.f32.mrb[0].mxu0
        %2054 = vmatprep.mubr.bf16.mxu0 0
        %2055 = vmatmul.mubr.bf16.gmra.mrb[0].mxu0 %v1966
        %v2056 = vpop.f32.mrb[0].mxu0
        %v2057 = vadd.f32 0.0, %v2056
        %v2058 = vpop.f32.mrb[0].mxu0
        %v2059 = vpop.f32.mrb[0].mxu0
        %v2060 = vadd.f32 0.0, %v2059
        %v2061 = vpop.f32.mrb[0].mxu0
        %2062 = vmatprep.mubr.bf16.mxu0 0
        %2063 = vmatmul.mubr.bf16.gmra.mrb[0].mxu0 %v1969
        %v2064 = vpop.f32.mrb[0].mxu0
        %v2065 = vadd.f32 0.0, %v2064
        %v2066 = vpop.f32.mrb[0].mxu0
        %v2067 = vpop.f32.mrb[0].mxu0
        %v2068 = vadd.f32 0.0, %v2067
        %v2069 = vpop.f32.mrb[0].mxu0
        %2070 = vmatprep.mubr.bf16.mxu0 0
        %2071 = vmatmul.mubr.bf16.gmra.mrb[0].mxu0 %v1972
        %v2072 = vpop.f32.mrb[0].mxu0
        %v2073 = vadd.f32 0.0, %v2072
        %v2074 = vpop.f32.mrb[0].mxu0
        %v2075 = vpop.f32.mrb[0].mxu0
        %v2076 = vadd.f32 0.0, %v2075
        %v2077 = vpop.f32.mrb[0].mxu0
        %2078 = vdwg.mxu0
        %v2079 = vadd.f32 %v1818, %v2009
        %v2080 = vadd.f32 %v1819, %v2012
        %v2081 = vadd.f32 %v1820, %v2017
        %v2082 = vadd.f32 %v1821, %v2020
        %v2083 = vadd.f32 %v1822, %v2025
        %v2084 = vadd.f32 %v1823, %v2028
        %v2085 = vadd.f32 %v1824, %v2033
        %v2086 = vadd.f32 %v1825, %v2036
        %v2087 = vadd.f32 %v1826, %v2041
        %v2088 = vadd.f32 %v1827, %v2044
        %v2089 = vadd.f32 %v1828, %v2049
        %v2090 = vadd.f32 %v1829, %v2052
        %v2091 = vadd.f32 %v1830, %v2057
        %v2092 = vadd.f32 %v1831, %v2060
        %v2093 = vadd.f32 %v1832, %v2065
        %v2094 = vadd.f32 %v1833, %v2068
        %v2095 = vadd.f32 %v1834, %v2073
        %v2096 = vadd.f32 %v1835, %v2076
        %v2097 = vld [vmem:[%s252 + $0x10] sm:$0x8]
        %s2098 = scalar_lea.vmem %s1, 128
        %v2099 = vld [vmem:[%s2098] sm:$0xf]
        %v2100 = vld [vmem:[%s2098 + $0x4] sm:$0xf]
        %v2101 = vld [vmem:[%s2098 + $0x8] sm:$0xf]
        %v2102 = vld [vmem:[%s2098 + $0xc] sm:$0xf]
        %v2104 = vunpack.c.l.b16 %v2097
        %v2105 = vpack.c.b16 %v1627, %v2104
        %vm2106 = vcmask 1044480
        %v2107 = vrot.slane %v2105, 3
        %v2108 = vrot.slane %v1646, 3
        %v2109 = vsel %vm2106, %v2107, %v2108
        %v2110 = vrot.slane %v1647, 3
        %v2111 = vsel %vm2106, %v2108, %v2110
        %v2112 = vrot.slane %v1648, 3
        %v2113 = vsel %vm2106, %v2110, %v2112
        %v2114 = vrot.slane %v1649, 3
        %v2115 = vsel %vm2106, %v2112, %v2114
        %v2116 = vrot.slane %v1650, 3
        %v2117 = vsel %vm2106, %v2114, %v2116
        %v2118 = vrot.slane %v1651, 3
        %v2119 = vsel %vm2106, %v2116, %v2118
        %v2120 = vrot.slane %v1652, 3
        %v2121 = vsel %vm2106, %v2118, %v2120
        %v2122 = vrot.slane %v1653, 3
        %v2123 = vsel %vm2106, %v2120, %v2122
        %v2124 = vrot.slane %v1844, 3
        %v2125 = vsel %vm2106, %v2122, %v2124
        %v2130 = vunpack.c.l.b16 %v2099
        %v2131 = vunpack.c.l.b16 %v2100
        %v2132 = vunpack.c.l.b16 %v2101
        %v2133 = vunpack.c.l.b16 %v2102
        %v2134 = vpack.c.b16 %v2131, %v2130
        %v2135 = vpack.c.b16 %v2133, %v2132
        %v2139 = vsel %vm419, %v2109, 0
        %v2142 = vsel %vm419, %v2111, 0
        %v2145 = vsel %vm419, %v2113, 0
        %v2148 = vsel %vm419, %v2115, 0
        %v2151 = vsel %vm419, %v2117, 0
        %v2154 = vsel %vm419, %v2119, 0
        %v2157 = vsel %vm419, %v2121, 0
        %v2160 = vsel %vm419, %v2123, 0
        %v2163 = vsel %vm419, %v2125, 0
        %2165 = vmatprep.subr.bf16.mxu0 0
        %2166 = vmatpush1.bf16.msra.mxu0 %v2134
        %2167 = vmatprep.subr.bf16.mxu0 0
        %2168 = vmatpush1.bf16.msra.mxu0 %v2135
        %2169 = vmatprep.subr.bf16.mxu0 0
        %2170 = vmatpush1.bf16.msra.mxu0 0
        %2171 = vmatprep.subr.bf16.mxu0 0
        %2172 = vmatpush1.bf16.msra.mxu0 0
        %2173 = vmatprep.subr.bf16.mxu0 0
        %2174 = vmatpush1.bf16.msra.mxu0 0
        %2175 = vmatprep.subr.bf16.mxu0 0
        %2176 = vmatpush1.bf16.msra.mxu0 0
        %2177 = vmatprep.subr.bf16.mxu0 0
        %2178 = vmatpush1.bf16.msra.mxu0 0
        %2179 = vmatprep.subr.bf16.mxu0 0
        %2180 = vmatpush1.bf16.msra.mxu0 0
        %2181 = vmatprep.subr.bf16.mxu0 0
        %2182 = vmatpush1.bf16.msra.mxu0 0
        %2183 = vmatprep.subr.bf16.mxu0 0
        %2184 = vmatpush1.bf16.msra.mxu0 0
        %2185 = vmatprep.subr.bf16.mxu0 0
        %2186 = vmatpush1.bf16.msra.mxu0 0
        %2187 = vmatprep.subr.bf16.mxu0 0
        %2188 = vmatpush1.bf16.msra.mxu0 0
        %2189 = vmatprep.subr.bf16.mxu0 0
        %2190 = vmatpush1.bf16.msra.mxu0 0
        %2191 = vmatprep.subr.bf16.mxu0 0
        %2192 = vmatpush1.bf16.msra.mxu0 0
        %2193 = vmatprep.subr.bf16.mxu0 0
        %2194 = vmatpush1.bf16.msra.mxu0 0
        %2195 = vmatprep.subr.bf16.mxu0 0
        %2196 = vmatpush1.bf16.msra.mxu0 0
        %2197 = vmatprep.mubr.bf16.mxu0 0
        %2198 = vmatmul.mubr.bf16.gmra.mrb[0].mxu0 %v2139
        %v2199 = vpop.f32.mrb[0].mxu0
        %v2200 = vadd.f32 0.0, %v2199
        %v2201 = vpop.f32.mrb[0].mxu0
        %v2202 = vpop.f32.mrb[0].mxu0
        %v2203 = vadd.f32 0.0, %v2202
        %v2204 = vpop.f32.mrb[0].mxu0
        %2205 = vmatprep.mubr.bf16.mxu0 0
        %2206 = vmatmul.mubr.bf16.gmra.mrb[0].mxu0 %v2142
        %v2207 = vpop.f32.mrb[0].mxu0
        %v2208 = vadd.f32 0.0, %v2207
        %v2209 = vpop.f32.mrb[0].mxu0
        %v2210 = vpop.f32.mrb[0].mxu0
        %v2211 = vadd.f32 0.0, %v2210
        %v2212 = vpop.f32.mrb[0].mxu0
        %2213 = vmatprep.mubr.bf16.mxu0 0
        %2214 = vmatmul.mubr.bf16.gmra.mrb[0].mxu0 %v2145
        %v2215 = vpop.f32.mrb[0].mxu0
        %v2216 = vadd.f32 0.0, %v2215
        %v2217 = vpop.f32.mrb[0].mxu0
        %v2218 = vpop.f32.mrb[0].mxu0
        %v2219 = vadd.f32 0.0, %v2218
        %v2220 = vpop.f32.mrb[0].mxu0
        %2221 = vmatprep.mubr.bf16.mxu0 0
        %2222 = vmatmul.mubr.bf16.gmra.mrb[0].mxu0 %v2148
        %v2223 = vpop.f32.mrb[0].mxu0
        %v2224 = vadd.f32 0.0, %v2223
        %v2225 = vpop.f32.mrb[0].mxu0
        %v2226 = vpop.f32.mrb[0].mxu0
        %v2227 = vadd.f32 0.0, %v2226
        %v2228 = vpop.f32.mrb[0].mxu0
        %2229 = vmatprep.mubr.bf16.mxu0 0
        %2230 = vmatmul.mubr.bf16.gmra.mrb[0].mxu0 %v2151
        %v2231 = vpop.f32.mrb[0].mxu0
        %v2232 = vadd.f32 0.0, %v2231
        %v2233 = vpop.f32.mrb[0].mxu0
        %v2234 = vpop.f32.mrb[0].mxu0
        %v2235 = vadd.f32 0.0, %v2234
        %v2236 = vpop.f32.mrb[0].mxu0
        %2237 = vmatprep.mubr.bf16.mxu0 0
        %2238 = vmatmul.mubr.bf16.gmra.mrb[0].mxu0 %v2154
        %v2239 = vpop.f32.mrb[0].mxu0
        %v2240 = vadd.f32 0.0, %v2239
        %v2241 = vpop.f32.mrb[0].mxu0
        %v2242 = vpop.f32.mrb[0].mxu0
        %v2243 = vadd.f32 0.0, %v2242
        %v2244 = vpop.f32.mrb[0].mxu0
        %2245 = vmatprep.mubr.bf16.mxu0 0
        %2246 = vmatmul.mubr.bf16.gmra.mrb[0].mxu0 %v2157
        %v2247 = vpop.f32.mrb[0].mxu0
        %v2248 = vadd.f32 0.0, %v2247
        %v2249 = vpop.f32.mrb[0].mxu0
        %v2250 = vpop.f32.mrb[0].mxu0
        %v2251 = vadd.f32 0.0, %v2250
        %v2252 = vpop.f32.mrb[0].mxu0
        %2253 = vmatprep.mubr.bf16.mxu0 0
        %2254 = vmatmul.mubr.bf16.gmra.mrb[0].mxu0 %v2160
        %v2255 = vpop.f32.mrb[0].mxu0
        %v2256 = vadd.f32 0.0, %v2255
        %v2257 = vpop.f32.mrb[0].mxu0
        %v2258 = vpop.f32.mrb[0].mxu0
        %v2259 = vadd.f32 0.0, %v2258
        %v2260 = vpop.f32.mrb[0].mxu0
        %2261 = vmatprep.mubr.bf16.mxu0 0
        %2262 = vmatmul.mubr.bf16.gmra.mrb[0].mxu0 %v2163
        %v2263 = vpop.f32.mrb[0].mxu0
        %v2264 = vadd.f32 0.0, %v2263
        %v2265 = vpop.f32.mrb[0].mxu0
        %v2266 = vpop.f32.mrb[0].mxu0
        %v2267 = vadd.f32 0.0, %v2266
        %v2268 = vpop.f32.mrb[0].mxu0
        %2269 = vdwg.mxu0
        %v2270 = vadd.f32 %v2079, %v2200
        %v2271 = vadd.f32 %v2080, %v2203
        %v2272 = vadd.f32 %v2081, %v2208
        %v2273 = vadd.f32 %v2082, %v2211
        %v2274 = vadd.f32 %v2083, %v2216
        %v2275 = vadd.f32 %v2084, %v2219
        %v2276 = vadd.f32 %v2085, %v2224
        %v2277 = vadd.f32 %v2086, %v2227
        %v2278 = vadd.f32 %v2087, %v2232
        %v2279 = vadd.f32 %v2088, %v2235
        %v2280 = vadd.f32 %v2089, %v2240
        %v2281 = vadd.f32 %v2090, %v2243
        %v2282 = vadd.f32 %v2091, %v2248
        %v2283 = vadd.f32 %v2092, %v2251
        %v2284 = vadd.f32 %v2093, %v2256
        %v2285 = vadd.f32 %v2094, %v2259
        %v2286 = vadd.f32 %v2095, %v2264
        %v2287 = vadd.f32 %v2096, %v2267
        %v2288 = vld [vmem:[%s2] sm:$0x1]
        %v2290 = vlaneseq
        %v2291 = vshrl.u32 %v2290, 7
        %v2292 = vsub.s32 0, %v2291
        %v2293 = vrot.slane %v2288, %v2292
        %v2295 = vadd.f32 %v2270, %v2293
        %v2296 = vadd.f32 %v2271, %v2293
        %v2297 = vadd.f32 %v2272, %v2293
        %v2298 = vadd.f32 %v2273, %v2293
        %v2299 = vadd.f32 %v2274, %v2293
        %v2300 = vadd.f32 %v2275, %v2293
        %v2301 = vadd.f32 %v2276, %v2293
        %v2302 = vadd.f32 %v2277, %v2293
        %v2303 = vadd.f32 %v2278, %v2293
        %v2304 = vadd.f32 %v2279, %v2293
        %v2305 = vadd.f32 %v2280, %v2293
        %v2306 = vadd.f32 %v2281, %v2293
        %v2307 = vadd.f32 %v2282, %v2293
        %v2308 = vadd.f32 %v2283, %v2293
        %v2309 = vadd.f32 %v2284, %v2293
        %v2310 = vadd.f32 %v2285, %v2293
        %v2311 = vadd.f32 %v2286, %v2293
        %v2312 = vadd.f32 %v2287, %v2293
        %v2313 = vmax.f32 %v2295, 0.0
        %v2314 = vmax.f32 %v2296, 0.0
        %v2315 = vmax.f32 %v2297, 0.0
        %v2316 = vmax.f32 %v2298, 0.0
        %v2317 = vmax.f32 %v2299, 0.0
        %v2318 = vmax.f32 %v2300, 0.0
        %v2319 = vmax.f32 %v2301, 0.0
        %v2320 = vmax.f32 %v2302, 0.0
        %v2321 = vmax.f32 %v2303, 0.0
        %v2322 = vmax.f32 %v2304, 0.0
        %v2323 = vmax.f32 %v2305, 0.0
        %v2324 = vmax.f32 %v2306, 0.0
        %v2325 = vmax.f32 %v2307, 0.0
        %v2326 = vmax.f32 %v2308, 0.0
        %v2327 = vmax.f32 %v2309, 0.0
        %v2328 = vmax.f32 %v2310, 0.0
        %v2329 = vmax.f32 %v2311, 0.0
        %v2330 = vmax.f32 %v2312, 0.0
        %v2331 = vld [vmem:[%s3] sm:$0xff]
        %vm2332 = vcmask 523264
        %v2334 = vsel %vm2332, %v2331, 0
        %v2337 = vsel %vm2332, %v2313, 0
        %v2340 = vsel %vm2332, %v2314, 0
        %v2343 = vsel %vm2332, %v2315, 0
        %v2346 = vsel %vm2332, %v2316, 0
        %v2349 = vsel %vm2332, %v2317, 0
        %v2352 = vsel %vm2332, %v2318, 0
        %v2355 = vsel %vm2332, %v2319, 0
        %v2358 = vsel %vm2332, %v2320, 0
        %v2361 = vsel %vm2332, %v2321, 0
        %v2364 = vsel %vm2332, %v2322, 0
        %v2367 = vsel %vm2332, %v2323, 0
        %v2370 = vsel %vm2332, %v2324, 0
        %v2373 = vsel %vm2332, %v2325, 0
        %v2376 = vsel %vm2332, %v2326, 0
        %v2379 = vsel %vm2332, %v2327, 0
        %v2382 = vsel %vm2332, %v2328, 0
        %v2385 = vsel %vm2332, %v2329, 0
        %v2388 = vsel %vm2332, %v2330, 0
        %2390 = vmatprep.subr.mxu0 0.0
        %2391 = vmatpush1.xpose.msra.mxu0 %v2337
        %2392 = vmatprep.subr.mxu0 0.0
        %2393 = vmatpush1.xpose.msra.mxu0 %v2340
        %2394 = vmatprep.subr.mxu0 0.0
        %2395 = vmatpush1.xpose.msra.mxu0 %v2343
        %2396 = vmatprep.subr.mxu0 0.0
        %2397 = vmatpush1.xpose.msra.mxu0 %v2346
        %2398 = vmatprep.subr.mxu0 0.0
        %2399 = vmatpush1.xpose.msra.mxu0 %v2349
        %2400 = vmatprep.subr.mxu0 0.0
        %2401 = vmatpush1.xpose.msra.mxu0 %v2352
        %2402 = vmatprep.subr.mxu0 0.0
        %2403 = vmatpush1.xpose.msra.mxu0 %v2355
        %2404 = vmatprep.subr.mxu0 0.0
        %2405 = vmatpush1.xpose.msra.mxu0 %v2358
        %2406 = vmatprep.subr.mxu0 0.0
        %2407 = vmatpush1.xpose.msra.mxu0 %v2361
        %2408 = vmatprep.subr.mxu0 0.0
        %2409 = vmatpush1.xpose.msra.mxu0 %v2364
        %2410 = vmatprep.subr.mxu0 0.0
        %2411 = vmatpush1.xpose.msra.mxu0 %v2367
        %2412 = vmatprep.subr.mxu0 0.0
        %2413 = vmatpush1.xpose.msra.mxu0 %v2370
        %2414 = vmatprep.subr.mxu0 0.0
        %2415 = vmatpush1.xpose.msra.mxu0 %v2373
        %2416 = vmatprep.subr.mxu0 0.0
        %2417 = vmatpush1.xpose.msra.mxu0 %v2376
        %2418 = vmatprep.subr.mxu0 0.0
        %2419 = vmatpush1.xpose.msra.mxu0 %v2379
        %2420 = vmatprep.subr.mxu0 0.0
        %2421 = vmatpush1.xpose.msra.mxu0 %v2382
        %2422 = vmatprep.subr.mxu0 0.0
        %2423 = vmatpush1.xpose.msra.mxu0 %v2385
        %2424 = vmatprep.subr.mxu0 0.0
        %2425 = vmatpush1.xpose.msra.mxu0 %v2388
        %2426 = vmatprep.subr.mxu0 0.0
        %2427 = vmatpush1.xpose.msra.mxu0 0.0
        %2428 = vmatprep.subr.mxu0 0.0
        %2429 = vmatpush1.xpose.msra.mxu0 0.0
        %2430 = vmatprep.subr.mxu0 0.0
        %2431 = vmatpush1.xpose.msra.mxu0 0.0
        %2432 = vmatprep.subr.mxu0 0.0
        %2433 = vmatpush1.xpose.msra.mxu0 0.0
        %2434 = vmatprep.subr.mxu0 0.0
        %2435 = vmatpush1.xpose.msra.mxu0 0.0
        %2436 = vmatprep.subr.mxu0 0.0
        %2437 = vmatpush1.xpose.msra.mxu0 0.0
        %2438 = vmatprep.subr.mxu0 0.0
        %2439 = vmatpush1.xpose.msra.mxu0 0.0
        %2440 = vmatprep.subr.mxu0 0.0
        %2441 = vmatpush1.xpose.msra.mxu0 0.0
        %2442 = vmatprep.subr.mxu0 0.0
        %2443 = vmatpush1.xpose.msra.mxu0 0.0
        %2444 = vmatprep.subr.mxu0 0.0
        %2445 = vmatpush1.xpose.msra.mxu0 0.0
        %2446 = vmatprep.subr.mxu0 0.0
        %2447 = vmatpush1.xpose.msra.mxu0 0.0
        %2448 = vmatprep.subr.mxu0 0.0
        %2449 = vmatpush1.xpose.msra.mxu0 0.0
        %2450 = vmatprep.subr.mxu0 0.0
        %2451 = vmatpush1.xpose.msra.mxu0 0.0
        %2452 = vmatprep.subr.mxu0 0.0
        %2453 = vmatpush1.xpose.msra.mxu0 0.0
        %2454 = vmatprep.mubr.f32.mxu0 0.0
        %2455 = vmatmul.mubr.f32.gmra.mrb[0].mxu0 %v2334
        %v2456 = vpop.f32.mrb[0].mxu0
        %v2457 = vadd.f32 0.0, %v2456
        %v2458 = vpop.f32.mrb[0].mxu0
        %v2459 = vadd.f32 0.0, %v2458
        %2460 = vdwg.mxu0
        %v2461 = vld [vmem:[#allocation2] sm:$0x1]
        %s2462 = vtos %v2461
        %v2463 = vstv %s2462
        %v2464 = vadd.f32 %v2457, %v2463
        %v2465 = vadd.f32 %v2459, %v2463
        %v2468 = vcombine.low %v2464, %v2465
        %v2470 = vunpack.c.l.s4 1966171168
        %v2471 = vunpack.c.0.s8 %v2470
        %v2472 = vlaneseq
        %v2473 = vshrl.u32 %v2472, 7
        %v2474 = vsub.s32 %v2471, %v2473
        %v2475 = vrot.slane %v2468, %v2474
        %v2477 = vunpack.c.l.s4 1966171168
        %v2478 = vunpack.c.0.s8 %v2477
        %v2479 = vlaneseq
        %v2480 = vshrl.u32 %v2479, 7
        %v2481 = vsub.s32 %v2478, %v2480
        %v2482 = vrot.slane %v2475, %v2481
        %v2484 = vlaneseq
        %vm2485 = vcmp.ge.s32.totalorder %v2484, 0
        %vm2486 = vcmp.lt.s32.totalorder %v2484, 144
        %vm2487 = vmand %vm2485, %vm2486
        %2488 = vst.msk [vmem:[%s243] sm:$0x3] %vm2487, %v2482
        %s2489 = sand.u32 %s155, 1
        %s2490 = scalar_lea.sflag [#allocation4], %s2489
        %s2491 = sand.u32 %s155, 1
        %s2492 = smul.addr %s2491, 2
        %s2493 = scalar_lea.vmem [#allocation3], %s2492
        // Predicated region
        $region41: #{tpu_custom_call.1} parent=39 // pred_check
          %p2494 = pneg %p165
        $region42: #{tpu_custom_call.1} parent=39 // pred_check_branch
          %2496 = sbr.rel (%p2494) target = $region44
        $region43: #{tpu_custom_call.1} parent=39 // pred_region
          %s2498 = ssub.s32 32, 32
          %2499 = vsyncadd %s2490, %s2498
          %s2500 = smul.addr %s26, 2
          %s2501 = smul.addr %s25, 4
          %s2502 = sadd.s32 %s2500, %s2501
          %s2503 = smul.addr %s2502, 16
          %s2504 = scalar_lea.hbm %s5, %s2503
          %s2506 = sshll.u32 %s2493, 4
          %s2507 = int_to_ptr.vmem [resolvable:$true] %s2506
          %2509 = dma.vmem_to_hbm [thread:$0]  %s2507, 32, %s2504, %s2490
        $region44: #{tpu_custom_call.1} parent=39 // pred_fallthru
          _
      $region40: #{tpu_custom_call.1} parent=5 // pred_fallthru
        _
      %p2510 = scmp.le.s32.totalorder 2, %s16
      // Predicated region
      $region45: #{tpu_custom_call.1} parent=5 // pred_check
        %p2511 = pneg %p2510
      $region46: #{tpu_custom_call.1} parent=5 // pred_check_branch
        %2513 = sbr.rel (%p2511) target = $region48
      $region47: #{tpu_custom_call.1} parent=5 // pred_region
        %s2514 = ssub.s32 %s16, 2
        // Predicated region
        $region49: #{tpu_custom_call.1} parent=47 // pred_check
          %p2515 = pneg %p171
        $region50: #{tpu_custom_call.1} parent=47 // pred_check_branch
          %2517 = sbr.rel (%p2515) target = $region52
        $region51: #{tpu_custom_call.1} parent=47 // pred_region
          %s2518 = sand.u32 %s156, 1
          %s2519 = scalar_lea.sflag [#allocation4], %s2518
          %s2520 = sand.u32 %s156, 1
          %s2521 = smul.addr %s2520, 2
          %s2522 = scalar_lea.vmem [#allocation3], %s2521
          %2523 = dma.done %s2519, 32
        $region52: #{tpu_custom_call.1} parent=47 // pred_fallthru
          _
      $region48: #{tpu_custom_call.1} parent=5 // pred_fallthru
        _
    $region6: #{tpu_custom_call.1} parent=1 // loop_footer
      %s20 = sadd.s32 1, %s16
    $region7: #{tpu_custom_call.1} parent=1 // loop_footer_branch
      %15 = sbr.rel target = $region3
    $region8: #{tpu_custom_call.1} parent=1 // loop_exit
      _
    %2524 = vsyncpa [#allocation4], 1
    %s2525 = scalar_lea.sflag [#allocation4], 1
    %2526 = vsyncpa %s2525, 1

</llo_original>
